<compile_context>
chip_gen: v7x
topology: tpu7x:2x2x1
jax: 0.10.0
libtpu: 0.0.40
codegen_flags: <defaults>
</compile_context>

<pallas_src>
import jax
import jax.numpy as jnp
from jax.experimental import pallas as pl
from jax.experimental.pallas import tpu as pltpu


# ----------------------------------------------------------------------------
# Kernel
# ----------------------------------------------------------------------------
def deeplog_kernel(x_ref,
                   w_ih0_ref, w_hh0_ref, b0_ref,
                   w_l1_ref, b1_ref,
                   w_fc_ref, b_fc_ref,
                   out_ref):
    """Whole forward pass, single invocation (no grid).

    Shapes:
      x_ref    : (B, T)   f32   input sequence (feature dim of size 1 squeezed)
      w_ih0_ref: (1, 4H)  f32   layer-0 input->gates (gate cols in [i,f,o,g])
      w_hh0_ref: (H, 4H)  f32/bf16  layer-0 hidden->gates
      b0_ref   : (1, 4H)  f32   b_ih_l0 + b_hh_l0
      w_l1_ref : (2H, 4H) f32/bf16  fused [w_ih_l1; w_hh_l1]
      b1_ref   : (1, 4H)  f32   b_ih_l1 + b_hh_l1
      w_fc_ref : (H, Kp)  f32/bf16  fc.weight^T zero-padded to Kp (mult of 128)
      b_fc_ref : (1, Kp)  f32
      out_ref  : (B, Kp)  f32
    """
    B, T = x_ref.shape
    H = w_hh0_ref.shape[0]
    mxu_dtype = w_hh0_ref.dtype          # bf16 on v6e/v7x, f32 otherwise

    w_hh0 = w_hh0_ref[...]
    w_l1 = w_l1_ref[...]
    b1 = b1_ref[...]

    # Hoisted input projection + layer-0 bias, off the per-step critical path.
    # Layout (T, B, 4H): per-step indexing is along the leading (untiled) axis,
    # each slice is a dense (B, 4H) tile.
    x_tb = jnp.transpose(x_ref[...])                                # (T, B)
    xg0 = (x_tb[:, :, None] * w_ih0_ref[...][None, :, :]
           + b0_ref[...][None, :, :])                               # (T, B, 4H)

    def cell(gates, c_prev):
        # Gate columns were permuted offline to [i, f, o, g]:
        # one sigmoid over a contiguous 3H slab, one tanh over the last H.
        sig = jax.nn.sigmoid(gates[:, :3 * H])
        g = jnp.tanh(gates[:, 3 * H:])
        i = sig[:, 0 * H:1 * H]
        f = sig[:, 1 * H:2 * H]
        o = sig[:, 2 * H:3 * H]
        c = f * c_prev + i * g
        h = o * jnp.tanh(c)
        return h, c

    zeros = jnp.zeros((B, H), jnp.float32)
    h0, c0, h1, c1 = zeros, zeros, zeros, zeros

    # T is small and static -> full unroll keeps all slicing static.
    # (If T/H grow in production, switch to lax.fori_loop(..., unroll=small)
    #  and read weights from refs inside the loop to bound vreg live ranges.)
    for t in range(T):
        # layer 0: one MXU dot per step (input projection already hoisted).
        gates0 = xg0[t] + jnp.dot(h0.astype(mxu_dtype), w_hh0,
                                  preferred_element_type=jnp.float32)
        h0, c0 = cell(gates0, c0)

        # layer 1: fused single dot over the concatenated (B, 2H) input.
        h01 = jnp.concatenate([h0, h1], axis=1).astype(mxu_dtype)   # (B, 2H)
        gates1 = jnp.dot(h01, w_l1,
                         preferred_element_type=jnp.float32) + b1
        h1, c1 = cell(gates1, c1)

    # fc applied to the last time-step output of the top layer; lane-dense store.
    out_ref[...] = (jnp.dot(h1.astype(mxu_dtype), w_fc_ref[...],
                            preferred_element_type=jnp.float32)
                    + b_fc_ref[...])


# ----------------------------------------------------------------------------
# Offline parameter preparation (gate permutation, fusion, padding, dtype)
# ----------------------------------------------------------------------------
def _permute_gates(w, H):
    """Reorder 4H gate columns from torch [i, f, g, o] to kernel [i, f, o, g]."""
    return jnp.concatenate(
        [w[..., 0 * H:2 * H], w[..., 3 * H:4 * H], w[..., 2 * H:3 * H]], axis=-1)


def prepare_params(params, *, use_bf16_matmul=False):
    """Torch-ordered (transposed) params -> kernel-ready params."""
    w_ih0, w_hh0, b0, w_ih1, w_hh1, b1, w_fc, b_fc = params
    H = w_hh0.shape[0]
    K = w_fc.shape[1]
    K_pad = max(128, -(-K // 128) * 128)          # lane-dense output slab

    w_ih0_p = _permute_gates(w_ih0, H)
    w_hh0_p = _permute_gates(w_hh0, H)
    b0_p = _permute_gates(b0, H)
    # Fuse layer-1 input/hidden projections into one (2H, 4H) weight.
    w_l1 = jnp.concatenate([_permute_gates(w_ih1, H),
                            _permute_gates(w_hh1, H)], axis=0)
    b1_p = _permute_gates(b1, H)

    w_fc_p = jnp.zeros((H, K_pad), jnp.float32).at[:, :K].set(w_fc)
    b_fc_p = jnp.zeros((1, K_pad), jnp.float32).at[:, :K].set(b_fc)

    if use_bf16_matmul:
        # v6e/v7x: bf16 MXU operands; biases / input projection / state stay f32.
        w_hh0_p = w_hh0_p.astype(jnp.bfloat16)
        w_l1 = w_l1.astype(jnp.bfloat16)
        w_fc_p = w_fc_p.astype(jnp.bfloat16)

    return (w_ih0_p, w_hh0_p, b0_p, w_l1, b1_p, w_fc_p, b_fc_p)


# ----------------------------------------------------------------------------
# Wrapper
# ----------------------------------------------------------------------------
def deeplog_forward(x, prep_params, num_keys):
    """x: (B, T) f32 (feature dim of size 1 already squeezed). Returns (B, K)."""
    w_ih0, w_hh0, b0, w_l1, b1, w_fc, b_fc = prep_params
    B, T = x.shape
    K_pad = w_fc.shape[1]

    # Keep batch a multiple of 8 sublanes inside the kernel.
    B_pad = -(-B // 8) * 8
    if B_pad != B:
        x = jnp.zeros((B_pad, T), x.dtype).at[:B].set(x)

    vmem = lambda: pl.BlockSpec(memory_space=pltpu.MemorySpace.VMEM)

    # Single invocation, no grid -> no software-pipeline machinery for 8 tiny
    # operands.  (If the deployment batch grows, add a "parallel" grid axis
    # over B with weight BlockSpecs pinned to block 0 so v7x's second
    # TensorCore is used.)
    out = pl.pallas_call(
        deeplog_kernel,
        out_shape=jax.ShapeDtypeStruct((B_pad, K_pad), jnp.float32),
        in_specs=[vmem() for _ in range(8)],
        out_specs=vmem(),
    )(x, w_ih0, w_hh0, b0, w_l1, b1, w_fc, b_fc)

    return out[:B, :num_keys]


# ----------------------------------------------------------------------------
# Init + pure-JAX reference (torch gate order / unfused, for validation)
# ----------------------------------------------------------------------------
def init_params(key, num_keys, hidden_size):
    """Params matching the PyTorch module's shapes, stored transposed (in, out),
    torch gate order [i, f, g, o], bias pairs pre-summed."""
    H, K = hidden_size, num_keys
    bound = 1.0 / jnp.sqrt(jnp.float32(H))
    ks = jax.random.split(key, 10)
    u = lambda k, shape: jax.random.uniform(k, shape, jnp.float32, -bound, bound)

    w_ih0 = u(ks[0], (1, 4 * H))
    w_hh0 = u(ks[1], (H, 4 * H))
    b0 = u(ks[2], (1, 4 * H)) + u(ks[3], (1, 4 * H))     # b_ih_l0 + b_hh_l0
    w_ih1 = u(ks[4], (H, 4 * H))
    w_hh1 = u(ks[5], (H, 4 * H))
    b1 = u(ks[6], (1, 4 * H)) + u(ks[7], (1, 4 * H))     # b_ih_l1 + b_hh_l1
    w_fc = u(ks[8], (H, K))
    b_fc = u(ks[9], (1, K))
    return (w_ih0, w_hh0, b0, w_ih1, w_hh1, b1, w_fc, b_fc)


def reference_forward(x, params):
    """Pure-JAX reference with torch gate order and unfused weights."""
    (w_ih0, w_hh0, b0, w_ih1, w_hh1, b1, w_fc, b_fc) = params
    B, T = x.shape
    H = w_hh0.shape[0]

    def cell(gates, c_prev):
        i = jax.nn.sigmoid(gates[:, 0 * H:1 * H])
        f = jax.nn.sigmoid(gates[:, 1 * H:2 * H])
        g = jnp.tanh(gates[:, 2 * H:3 * H])
        o = jax.nn.sigmoid(gates[:, 3 * H:4 * H])
        c = f * c_prev + i * g
        return o * jnp.tanh(c), c

    h0 = c0 = h1 = c1 = jnp.zeros((B, H), jnp.float32)
    for t in range(T):
        x_t = x[:, t:t + 1]
        h0, c0 = cell(x_t * w_ih0 + h0 @ w_hh0 + b0, c0)
        h1, c1 = cell(h0 @ w_ih1 + h1 @ w_hh1 + b1, c1)
    return h1 @ w_fc + b_fc


if __name__ == "__main__":
    # Small shapes consistent with the module: batch=2, seq=8, hidden=32, num_keys=16.
    B, T, H, K = 2, 8, 32, 16

    key = jax.random.PRNGKey(0)
    k_x, k_p = jax.random.split(key)

    # PyTorch forward takes (B, T, 1); squeeze the trailing feature dim.
    x_seq = jax.random.normal(k_x, (B, T, 1), jnp.float32)
    x = x_seq[..., 0]                                     # (B, T)

    params = init_params(k_p, num_keys=K, hidden_size=H)
    ref = reference_forward(x, params)

    # f32 MXU path: bitwise-faithful to the torch math, valid on v5e/v6e/v7x.
    prep_f32 = prepare_params(params, use_bf16_matmul=False)
    out = jax.block_until_ready(deeplog_forward(x, prep_f32, num_keys=K))
    assert out.shape == (B, K)
    assert jnp.allclose(out, ref, atol=1e-5, rtol=1e-5), (out, ref)

    # bf16 MXU-operand path (v6e/v7x): weights cast offline, f32 accumulation,
    # f32 gate/cell math.  Looser tolerance reflects bf16 weight quantization.
    prep_bf16 = prepare_params(params, use_bf16_matmul=True)
    out_bf16 = jax.block_until_ready(deeplog_forward(x, prep_bf16, num_keys=K))
    assert jnp.allclose(out_bf16, ref, atol=5e-2, rtol=5e-2), (out_bf16, ref)

    print("KERNEL_OK")
</pallas_src>

<mosaic_0001>
module attributes {stable_mosaic.version = 11 : i64} {
  func.func @deeplog_kernel(%arg0: memref<8x8xf32, #tpu.memory_space<vmem>>, %arg1: memref<1x128xf32, #tpu.memory_space<vmem>>, %arg2: memref<32x128xf32, #tpu.memory_space<vmem>>, %arg3: memref<1x128xf32, #tpu.memory_space<vmem>>, %arg4: memref<64x128xf32, #tpu.memory_space<vmem>>, %arg5: memref<1x128xf32, #tpu.memory_space<vmem>>, %arg6: memref<32x128xf32, #tpu.memory_space<vmem>>, %arg7: memref<1x128xf32, #tpu.memory_space<vmem>>, %arg8: memref<8x128xf32, #tpu.memory_space<vmem>>) attributes {dimension_semantics = [], scalar_prefetch = 0 : i64, scratch_operands = 0 : i64, tpu.core_type = #tpu.core_type<tc>} {
    %c0 = arith.constant 0 : index
    %c0_0 = arith.constant 0 : index
    %0 = vector.load %arg2[%c0, %c0_0] : memref<32x128xf32, #tpu.memory_space<vmem>>, vector<32x128xf32>
    %c0_1 = arith.constant 0 : index
    %c0_2 = arith.constant 0 : index
    %1 = vector.load %arg4[%c0_1, %c0_2] : memref<64x128xf32, #tpu.memory_space<vmem>>, vector<64x128xf32>
    %c0_3 = arith.constant 0 : index
    %c0_4 = arith.constant 0 : index
    %2 = vector.load %arg5[%c0_3, %c0_4] : memref<1x128xf32, #tpu.memory_space<vmem>>, vector<1x128xf32>
    %c0_5 = arith.constant 0 : index
    %c0_6 = arith.constant 0 : index
    %3 = vector.load %arg0[%c0_5, %c0_6] : memref<8x8xf32, #tpu.memory_space<vmem>>, vector<8x8xf32>
    %4 = tpu.transpose %3, [1, 0] : vector<8x8xf32> -> vector<8x8xf32>
    %5 = vector.shape_cast %4 : vector<8x8xf32> to vector<8x8x1xf32>
    %c0_7 = arith.constant 0 : index
    %c0_8 = arith.constant 0 : index
    %6 = vector.load %arg1[%c0_7, %c0_8] : memref<1x128xf32, #tpu.memory_space<vmem>>, vector<1x128xf32>
    %7 = vector.shape_cast %6 : vector<1x128xf32> to vector<1x1x128xf32>
    %8 = vector.broadcast %5 : vector<8x8x1xf32> to vector<8x8x128xf32>
    %9 = vector.broadcast %7 : vector<1x1x128xf32> to vector<8x8x128xf32>
    %10 = arith.mulf %8, %9 : vector<8x8x128xf32>
    %c0_9 = arith.constant 0 : index
    %c0_10 = arith.constant 0 : index
    %11 = vector.load %arg3[%c0_9, %c0_10] : memref<1x128xf32, #tpu.memory_space<vmem>>, vector<1x128xf32>
    %12 = vector.shape_cast %11 : vector<1x128xf32> to vector<1x1x128xf32>
    %13 = vector.broadcast %12 : vector<1x1x128xf32> to vector<8x8x128xf32>
    %14 = arith.addf %10, %13 : vector<8x8x128xf32>
    %cst = arith.constant 0.000000e+00 : f32
    %15 = vector.broadcast %cst : f32 to vector<8x32xf32>
    %16 = vector.extract_strided_slice %14 {offsets = [0, 0, 0], sizes = [1, 8, 128], strides = [1, 1, 1]} : vector<8x8x128xf32> to vector<1x8x128xf32>
    %17 = vector.shape_cast %16 : vector<1x8x128xf32> to vector<8x128xf32>
    %cst_11 = arith.constant dense<0.000000e+00> : vector<8x128xf32>
    %18 = tpu.matmul %15, %0, %cst_11 {dimension_numbers = #tpu.dot_dimension_numbers<[1], [0], [0], [1], [0, 0, 1, 1], [], []>} : vector<8x32xf32>, vector<32x128xf32>, vector<8x128xf32> -> vector<8x128xf32>
    %19 = arith.addf %17, %18 : vector<8x128xf32>
    %20 = vector.extract_strided_slice %19 {offsets = [0, 0], sizes = [8, 96], strides = [1, 1]} : vector<8x128xf32> to vector<8x96xf32>
    %21 = arith.negf %20 : vector<8x96xf32>
    %22 = math.exp %21 : vector<8x96xf32>
    %cst_12 = arith.constant 1.000000e+00 : f32
    %23 = vector.broadcast %cst_12 : f32 to vector<8x96xf32>
    %24 = arith.addf %23, %22 : vector<8x96xf32>
    %25 = arith.divf %23, %24 : vector<8x96xf32>
    %26 = vector.extract_strided_slice %19 {offsets = [0, 96], sizes = [8, 32], strides = [1, 1]} : vector<8x128xf32> to vector<8x32xf32>
    %27 = math.tanh %26 : vector<8x32xf32>
    %28 = vector.extract_strided_slice %25 {offsets = [0, 0], sizes = [8, 32], strides = [1, 1]} : vector<8x96xf32> to vector<8x32xf32>
    %29 = vector.extract_strided_slice %25 {offsets = [0, 32], sizes = [8, 32], strides = [1, 1]} : vector<8x96xf32> to vector<8x32xf32>
    %30 = vector.extract_strided_slice %25 {offsets = [0, 64], sizes = [8, 32], strides = [1, 1]} : vector<8x96xf32> to vector<8x32xf32>
    %31 = arith.mulf %29, %15 : vector<8x32xf32>
    %32 = arith.mulf %28, %27 : vector<8x32xf32>
    %33 = arith.addf %31, %32 : vector<8x32xf32>
    %34 = math.tanh %33 : vector<8x32xf32>
    %35 = arith.mulf %30, %34 : vector<8x32xf32>
    %36 = tpu.concatenate %35, %15 in 1 : vector<8x32xf32>, vector<8x32xf32> -> vector<8x64xf32>
    %cst_13 = arith.constant dense<0.000000e+00> : vector<8x128xf32>
    %37 = tpu.matmul %36, %1, %cst_13 {dimension_numbers = #tpu.dot_dimension_numbers<[1], [0], [0], [1], [0, 0, 1, 1], [], []>} : vector<8x64xf32>, vector<64x128xf32>, vector<8x128xf32> -> vector<8x128xf32>
    %38 = vector.broadcast %2 : vector<1x128xf32> to vector<8x128xf32>
    %39 = arith.addf %37, %38 : vector<8x128xf32>
    %40 = vector.extract_strided_slice %39 {offsets = [0, 0], sizes = [8, 96], strides = [1, 1]} : vector<8x128xf32> to vector<8x96xf32>
    %41 = arith.negf %40 : vector<8x96xf32>
    %42 = math.exp %41 : vector<8x96xf32>
    %cst_14 = arith.constant 1.000000e+00 : f32
    %43 = vector.broadcast %cst_14 : f32 to vector<8x96xf32>
    %44 = arith.addf %43, %42 : vector<8x96xf32>
    %45 = arith.divf %43, %44 : vector<8x96xf32>
    %46 = vector.extract_strided_slice %39 {offsets = [0, 96], sizes = [8, 32], strides = [1, 1]} : vector<8x128xf32> to vector<8x32xf32>
    %47 = math.tanh %46 : vector<8x32xf32>
    %48 = vector.extract_strided_slice %45 {offsets = [0, 0], sizes = [8, 32], strides = [1, 1]} : vector<8x96xf32> to vector<8x32xf32>
    %49 = vector.extract_strided_slice %45 {offsets = [0, 32], sizes = [8, 32], strides = [1, 1]} : vector<8x96xf32> to vector<8x32xf32>
    %50 = vector.extract_strided_slice %45 {offsets = [0, 64], sizes = [8, 32], strides = [1, 1]} : vector<8x96xf32> to vector<8x32xf32>
    %51 = arith.mulf %49, %15 : vector<8x32xf32>
    %52 = arith.mulf %48, %47 : vector<8x32xf32>
    %53 = arith.addf %51, %52 : vector<8x32xf32>
    %54 = math.tanh %53 : vector<8x32xf32>
    %55 = arith.mulf %50, %54 : vector<8x32xf32>
    %56 = vector.extract_strided_slice %14 {offsets = [1, 0, 0], sizes = [1, 8, 128], strides = [1, 1, 1]} : vector<8x8x128xf32> to vector<1x8x128xf32>
    %57 = vector.shape_cast %56 : vector<1x8x128xf32> to vector<8x128xf32>
    %cst_15 = arith.constant dense<0.000000e+00> : vector<8x128xf32>
    %58 = tpu.matmul %35, %0, %cst_15 {dimension_numbers = #tpu.dot_dimension_numbers<[1], [0], [0], [1], [0, 0, 1, 1], [], []>} : vector<8x32xf32>, vector<32x128xf32>, vector<8x128xf32> -> vector<8x128xf32>
    %59 = arith.addf %57, %58 : vector<8x128xf32>
    %60 = vector.extract_strided_slice %59 {offsets = [0, 0], sizes = [8, 96], strides = [1, 1]} : vector<8x128xf32> to vector<8x96xf32>
    %61 = arith.negf %60 : vector<8x96xf32>
    %62 = math.exp %61 : vector<8x96xf32>
    %cst_16 = arith.constant 1.000000e+00 : f32
    %63 = vector.broadcast %cst_16 : f32 to vector<8x96xf32>
    %64 = arith.addf %63, %62 : vector<8x96xf32>
    %65 = arith.divf %63, %64 : vector<8x96xf32>
    %66 = vector.extract_strided_slice %59 {offsets = [0, 96], sizes = [8, 32], strides = [1, 1]} : vector<8x128xf32> to vector<8x32xf32>
    %67 = math.tanh %66 : vector<8x32xf32>
    %68 = vector.extract_strided_slice %65 {offsets = [0, 0], sizes = [8, 32], strides = [1, 1]} : vector<8x96xf32> to vector<8x32xf32>
    %69 = vector.extract_strided_slice %65 {offsets = [0, 32], sizes = [8, 32], strides = [1, 1]} : vector<8x96xf32> to vector<8x32xf32>
    %70 = vector.extract_strided_slice %65 {offsets = [0, 64], sizes = [8, 32], strides = [1, 1]} : vector<8x96xf32> to vector<8x32xf32>
    %71 = arith.mulf %69, %33 : vector<8x32xf32>
    %72 = arith.mulf %68, %67 : vector<8x32xf32>
    %73 = arith.addf %71, %72 : vector<8x32xf32>
    %74 = math.tanh %73 : vector<8x32xf32>
    %75 = arith.mulf %70, %74 : vector<8x32xf32>
    %76 = tpu.concatenate %75, %55 in 1 : vector<8x32xf32>, vector<8x32xf32> -> vector<8x64xf32>
    %cst_17 = arith.constant dense<0.000000e+00> : vector<8x128xf32>
    %77 = tpu.matmul %76, %1, %cst_17 {dimension_numbers = #tpu.dot_dimension_numbers<[1], [0], [0], [1], [0, 0, 1, 1], [], []>} : vector<8x64xf32>, vector<64x128xf32>, vector<8x128xf32> -> vector<8x128xf32>
    %78 = vector.broadcast %2 : vector<1x128xf32> to vector<8x128xf32>
    %79 = arith.addf %77, %78 : vector<8x128xf32>
    %80 = vector.extract_strided_slice %79 {offsets = [0, 0], sizes = [8, 96], strides = [1, 1]} : vector<8x128xf32> to vector<8x96xf32>
    %81 = arith.negf %80 : vector<8x96xf32>
    %82 = math.exp %81 : vector<8x96xf32>
    %cst_18 = arith.constant 1.000000e+00 : f32
    %83 = vector.broadcast %cst_18 : f32 to vector<8x96xf32>
    %84 = arith.addf %83, %82 : vector<8x96xf32>
    %85 = arith.divf %83, %84 : vector<8x96xf32>
    %86 = vector.extract_strided_slice %79 {offsets = [0, 96], sizes = [8, 32], strides = [1, 1]} : vector<8x128xf32> to vector<8x32xf32>
    %87 = math.tanh %86 : vector<8x32xf32>
    %88 = vector.extract_strided_slice %85 {offsets = [0, 0], sizes = [8, 32], strides = [1, 1]} : vector<8x96xf32> to vector<8x32xf32>
    %89 = vector.extract_strided_slice %85 {offsets = [0, 32], sizes = [8, 32], strides = [1, 1]} : vector<8x96xf32> to vector<8x32xf32>
    %90 = vector.extract_strided_slice %85 {offsets = [0, 64], sizes = [8, 32], strides = [1, 1]} : vector<8x96xf32> to vector<8x32xf32>
    %91 = arith.mulf %89, %53 : vector<8x32xf32>
    %92 = arith.mulf %88, %87 : vector<8x32xf32>
    %93 = arith.addf %91, %92 : vector<8x32xf32>
    %94 = math.tanh %93 : vector<8x32xf32>
    %95 = arith.mulf %90, %94 : vector<8x32xf32>
    %96 = vector.extract_strided_slice %14 {offsets = [2, 0, 0], sizes = [1, 8, 128], strides = [1, 1, 1]} : vector<8x8x128xf32> to vector<1x8x128xf32>
    %97 = vector.shape_cast %96 : vector<1x8x128xf32> to vector<8x128xf32>
    %cst_19 = arith.constant dense<0.000000e+00> : vector<8x128xf32>
    %98 = tpu.matmul %75, %0, %cst_19 {dimension_numbers = #tpu.dot_dimension_numbers<[1], [0], [0], [1], [0, 0, 1, 1], [], []>} : vector<8x32xf32>, vector<32x128xf32>, vector<8x128xf32> -> vector<8x128xf32>
    %99 = arith.addf %97, %98 : vector<8x128xf32>
    %100 = vector.extract_strided_slice %99 {offsets = [0, 0], sizes = [8, 96], strides = [1, 1]} : vector<8x128xf32> to vector<8x96xf32>
    %101 = arith.negf %100 : vector<8x96xf32>
    %102 = math.exp %101 : vector<8x96xf32>
    %cst_20 = arith.constant 1.000000e+00 : f32
    %103 = vector.broadcast %cst_20 : f32 to vector<8x96xf32>
    %104 = arith.addf %103, %102 : vector<8x96xf32>
    %105 = arith.divf %103, %104 : vector<8x96xf32>
    %106 = vector.extract_strided_slice %99 {offsets = [0, 96], sizes = [8, 32], strides = [1, 1]} : vector<8x128xf32> to vector<8x32xf32>
    %107 = math.tanh %106 : vector<8x32xf32>
    %108 = vector.extract_strided_slice %105 {offsets = [0, 0], sizes = [8, 32], strides = [1, 1]} : vector<8x96xf32> to vector<8x32xf32>
    %109 = vector.extract_strided_slice %105 {offsets = [0, 32], sizes = [8, 32], strides = [1, 1]} : vector<8x96xf32> to vector<8x32xf32>
    %110 = vector.extract_strided_slice %105 {offsets = [0, 64], sizes = [8, 32], strides = [1, 1]} : vector<8x96xf32> to vector<8x32xf32>
    %111 = arith.mulf %109, %73 : vector<8x32xf32>
    %112 = arith.mulf %108, %107 : vector<8x32xf32>
    %113 = arith.addf %111, %112 : vector<8x32xf32>
    %114 = math.tanh %113 : vector<8x32xf32>
    %115 = arith.mulf %110, %114 : vector<8x32xf32>
    %116 = tpu.concatenate %115, %95 in 1 : vector<8x32xf32>, vector<8x32xf32> -> vector<8x64xf32>
    %cst_21 = arith.constant dense<0.000000e+00> : vector<8x128xf32>
    %117 = tpu.matmul %116, %1, %cst_21 {dimension_numbers = #tpu.dot_dimension_numbers<[1], [0], [0], [1], [0, 0, 1, 1], [], []>} : vector<8x64xf32>, vector<64x128xf32>, vector<8x128xf32> -> vector<8x128xf32>
    %118 = vector.broadcast %2 : vector<1x128xf32> to vector<8x128xf32>
    %119 = arith.addf %117, %118 : vector<8x128xf32>
    %120 = vector.extract_strided_slice %119 {offsets = [0, 0], sizes = [8, 96], strides = [1, 1]} : vector<8x128xf32> to vector<8x96xf32>
    %121 = arith.negf %120 : vector<8x96xf32>
    %122 = math.exp %121 : vector<8x96xf32>
    %cst_22 = arith.constant 1.000000e+00 : f32
    %123 = vector.broadcast %cst_22 : f32 to vector<8x96xf32>
    %124 = arith.addf %123, %122 : vector<8x96xf32>
    %125 = arith.divf %123, %124 : vector<8x96xf32>
    %126 = vector.extract_strided_slice %119 {offsets = [0, 96], sizes = [8, 32], strides = [1, 1]} : vector<8x128xf32> to vector<8x32xf32>
    %127 = math.tanh %126 : vector<8x32xf32>
    %128 = vector.extract_strided_slice %125 {offsets = [0, 0], sizes = [8, 32], strides = [1, 1]} : vector<8x96xf32> to vector<8x32xf32>
    %129 = vector.extract_strided_slice %125 {offsets = [0, 32], sizes = [8, 32], strides = [1, 1]} : vector<8x96xf32> to vector<8x32xf32>
    %130 = vector.extract_strided_slice %125 {offsets = [0, 64], sizes = [8, 32], strides = [1, 1]} : vector<8x96xf32> to vector<8x32xf32>
    %131 = arith.mulf %129, %93 : vector<8x32xf32>
    %132 = arith.mulf %128, %127 : vector<8x32xf32>
    %133 = arith.addf %131, %132 : vector<8x32xf32>
    %134 = math.tanh %133 : vector<8x32xf32>
    %135 = arith.mulf %130, %134 : vector<8x32xf32>
    %136 = vector.extract_strided_slice %14 {offsets = [3, 0, 0], sizes = [1, 8, 128], strides = [1, 1, 1]} : vector<8x8x128xf32> to vector<1x8x128xf32>
    %137 = vector.shape_cast %136 : vector<1x8x128xf32> to vector<8x128xf32>
    %cst_23 = arith.constant dense<0.000000e+00> : vector<8x128xf32>
    %138 = tpu.matmul %115, %0, %cst_23 {dimension_numbers = #tpu.dot_dimension_numbers<[1], [0], [0], [1], [0, 0, 1, 1], [], []>} : vector<8x32xf32>, vector<32x128xf32>, vector<8x128xf32> -> vector<8x128xf32>
    %139 = arith.addf %137, %138 : vector<8x128xf32>
    %140 = vector.extract_strided_slice %139 {offsets = [0, 0], sizes = [8, 96], strides = [1, 1]} : vector<8x128xf32> to vector<8x96xf32>
    %141 = arith.negf %140 : vector<8x96xf32>
    %142 = math.exp %141 : vector<8x96xf32>
    %cst_24 = arith.constant 1.000000e+00 : f32
    %143 = vector.broadcast %cst_24 : f32 to vector<8x96xf32>
    %144 = arith.addf %143, %142 : vector<8x96xf32>
    %145 = arith.divf %143, %144 : vector<8x96xf32>
    %146 = vector.extract_strided_slice %139 {offsets = [0, 96], sizes = [8, 32], strides = [1, 1]} : vector<8x128xf32> to vector<8x32xf32>
    %147 = math.tanh %146 : vector<8x32xf32>
    %148 = vector.extract_strided_slice %145 {offsets = [0, 0], sizes = [8, 32], strides = [1, 1]} : vector<8x96xf32> to vector<8x32xf32>
    %149 = vector.extract_strided_slice %145 {offsets = [0, 32], sizes = [8, 32], strides = [1, 1]} : vector<8x96xf32> to vector<8x32xf32>
    %150 = vector.extract_strided_slice %145 {offsets = [0, 64], sizes = [8, 32], strides = [1, 1]} : vector<8x96xf32> to vector<8x32xf32>
    %151 = arith.mulf %149, %113 : vector<8x32xf32>
    %152 = arith.mulf %148, %147 : vector<8x32xf32>
    %153 = arith.addf %151, %152 : vector<8x32xf32>
    %154 = math.tanh %153 : vector<8x32xf32>
    %155 = arith.mulf %150, %154 : vector<8x32xf32>
    %156 = tpu.concatenate %155, %135 in 1 : vector<8x32xf32>, vector<8x32xf32> -> vector<8x64xf32>
    %cst_25 = arith.constant dense<0.000000e+00> : vector<8x128xf32>
    %157 = tpu.matmul %156, %1, %cst_25 {dimension_numbers = #tpu.dot_dimension_numbers<[1], [0], [0], [1], [0, 0, 1, 1], [], []>} : vector<8x64xf32>, vector<64x128xf32>, vector<8x128xf32> -> vector<8x128xf32>
    %158 = vector.broadcast %2 : vector<1x128xf32> to vector<8x128xf32>
    %159 = arith.addf %157, %158 : vector<8x128xf32>
    %160 = vector.extract_strided_slice %159 {offsets = [0, 0], sizes = [8, 96], strides = [1, 1]} : vector<8x128xf32> to vector<8x96xf32>
    %161 = arith.negf %160 : vector<8x96xf32>
    %162 = math.exp %161 : vector<8x96xf32>
    %cst_26 = arith.constant 1.000000e+00 : f32
    %163 = vector.broadcast %cst_26 : f32 to vector<8x96xf32>
    %164 = arith.addf %163, %162 : vector<8x96xf32>
    %165 = arith.divf %163, %164 : vector<8x96xf32>
    %166 = vector.extract_strided_slice %159 {offsets = [0, 96], sizes = [8, 32], strides = [1, 1]} : vector<8x128xf32> to vector<8x32xf32>
    %167 = math.tanh %166 : vector<8x32xf32>
    %168 = vector.extract_strided_slice %165 {offsets = [0, 0], sizes = [8, 32], strides = [1, 1]} : vector<8x96xf32> to vector<8x32xf32>
    %169 = vector.extract_strided_slice %165 {offsets = [0, 32], sizes = [8, 32], strides = [1, 1]} : vector<8x96xf32> to vector<8x32xf32>
    %170 = vector.extract_strided_slice %165 {offsets = [0, 64], sizes = [8, 32], strides = [1, 1]} : vector<8x96xf32> to vector<8x32xf32>
    %171 = arith.mulf %169, %133 : vector<8x32xf32>
    %172 = arith.mulf %168, %167 : vector<8x32xf32>
    %173 = arith.addf %171, %172 : vector<8x32xf32>
    %174 = math.tanh %173 : vector<8x32xf32>
    %175 = arith.mulf %170, %174 : vector<8x32xf32>
    %176 = vector.extract_strided_slice %14 {offsets = [4, 0, 0], sizes = [1, 8, 128], strides = [1, 1, 1]} : vector<8x8x128xf32> to vector<1x8x128xf32>
    %177 = vector.shape_cast %176 : vector<1x8x128xf32> to vector<8x128xf32>
    %cst_27 = arith.constant dense<0.000000e+00> : vector<8x128xf32>
    %178 = tpu.matmul %155, %0, %cst_27 {dimension_numbers = #tpu.dot_dimension_numbers<[1], [0], [0], [1], [0, 0, 1, 1], [], []>} : vector<8x32xf32>, vector<32x128xf32>, vector<8x128xf32> -> vector<8x128xf32>
    %179 = arith.addf %177, %178 : vector<8x128xf32>
    %180 = vector.extract_strided_slice %179 {offsets = [0, 0], sizes = [8, 96], strides = [1, 1]} : vector<8x128xf32> to vector<8x96xf32>
    %181 = arith.negf %180 : vector<8x96xf32>
    %182 = math.exp %181 : vector<8x96xf32>
    %cst_28 = arith.constant 1.000000e+00 : f32
    %183 = vector.broadcast %cst_28 : f32 to vector<8x96xf32>
    %184 = arith.addf %183, %182 : vector<8x96xf32>
    %185 = arith.divf %183, %184 : vector<8x96xf32>
    %186 = vector.extract_strided_slice %179 {offsets = [0, 96], sizes = [8, 32], strides = [1, 1]} : vector<8x128xf32> to vector<8x32xf32>
    %187 = math.tanh %186 : vector<8x32xf32>
    %188 = vector.extract_strided_slice %185 {offsets = [0, 0], sizes = [8, 32], strides = [1, 1]} : vector<8x96xf32> to vector<8x32xf32>
    %189 = vector.extract_strided_slice %185 {offsets = [0, 32], sizes = [8, 32], strides = [1, 1]} : vector<8x96xf32> to vector<8x32xf32>
    %190 = vector.extract_strided_slice %185 {offsets = [0, 64], sizes = [8, 32], strides = [1, 1]} : vector<8x96xf32> to vector<8x32xf32>
    %191 = arith.mulf %189, %153 : vector<8x32xf32>
    %192 = arith.mulf %188, %187 : vector<8x32xf32>
    %193 = arith.addf %191, %192 : vector<8x32xf32>
    %194 = math.tanh %193 : vector<8x32xf32>
    %195 = arith.mulf %190, %194 : vector<8x32xf32>
    %196 = tpu.concatenate %195, %175 in 1 : vector<8x32xf32>, vector<8x32xf32> -> vector<8x64xf32>
    %cst_29 = arith.constant dense<0.000000e+00> : vector<8x128xf32>
    %197 = tpu.matmul %196, %1, %cst_29 {dimension_numbers = #tpu.dot_dimension_numbers<[1], [0], [0], [1], [0, 0, 1, 1], [], []>} : vector<8x64xf32>, vector<64x128xf32>, vector<8x128xf32> -> vector<8x128xf32>
    %198 = vector.broadcast %2 : vector<1x128xf32> to vector<8x128xf32>
    %199 = arith.addf %197, %198 : vector<8x128xf32>
    %200 = vector.extract_strided_slice %199 {offsets = [0, 0], sizes = [8, 96], strides = [1, 1]} : vector<8x128xf32> to vector<8x96xf32>
    %201 = arith.negf %200 : vector<8x96xf32>
    %202 = math.exp %201 : vector<8x96xf32>
    %cst_30 = arith.constant 1.000000e+00 : f32
    %203 = vector.broadcast %cst_30 : f32 to vector<8x96xf32>
    %204 = arith.addf %203, %202 : vector<8x96xf32>
    %205 = arith.divf %203, %204 : vector<8x96xf32>
    %206 = vector.extract_strided_slice %199 {offsets = [0, 96], sizes = [8, 32], strides = [1, 1]} : vector<8x128xf32> to vector<8x32xf32>
    %207 = math.tanh %206 : vector<8x32xf32>
    %208 = vector.extract_strided_slice %205 {offsets = [0, 0], sizes = [8, 32], strides = [1, 1]} : vector<8x96xf32> to vector<8x32xf32>
    %209 = vector.extract_strided_slice %205 {offsets = [0, 32], sizes = [8, 32], strides = [1, 1]} : vector<8x96xf32> to vector<8x32xf32>
    %210 = vector.extract_strided_slice %205 {offsets = [0, 64], sizes = [8, 32], strides = [1, 1]} : vector<8x96xf32> to vector<8x32xf32>
    %211 = arith.mulf %209, %173 : vector<8x32xf32>
    %212 = arith.mulf %208, %207 : vector<8x32xf32>
    %213 = arith.addf %211, %212 : vector<8x32xf32>
    %214 = math.tanh %213 : vector<8x32xf32>
    %215 = arith.mulf %210, %214 : vector<8x32xf32>
    %216 = vector.extract_strided_slice %14 {offsets = [5, 0, 0], sizes = [1, 8, 128], strides = [1, 1, 1]} : vector<8x8x128xf32> to vector<1x8x128xf32>
    %217 = vector.shape_cast %216 : vector<1x8x128xf32> to vector<8x128xf32>
    %cst_31 = arith.constant dense<0.000000e+00> : vector<8x128xf32>
    %218 = tpu.matmul %195, %0, %cst_31 {dimension_numbers = #tpu.dot_dimension_numbers<[1], [0], [0], [1], [0, 0, 1, 1], [], []>} : vector<8x32xf32>, vector<32x128xf32>, vector<8x128xf32> -> vector<8x128xf32>
    %219 = arith.addf %217, %218 : vector<8x128xf32>
    %220 = vector.extract_strided_slice %219 {offsets = [0, 0], sizes = [8, 96], strides = [1, 1]} : vector<8x128xf32> to vector<8x96xf32>
    %221 = arith.negf %220 : vector<8x96xf32>
    %222 = math.exp %221 : vector<8x96xf32>
    %cst_32 = arith.constant 1.000000e+00 : f32
    %223 = vector.broadcast %cst_32 : f32 to vector<8x96xf32>
    %224 = arith.addf %223, %222 : vector<8x96xf32>
    %225 = arith.divf %223, %224 : vector<8x96xf32>
    %226 = vector.extract_strided_slice %219 {offsets = [0, 96], sizes = [8, 32], strides = [1, 1]} : vector<8x128xf32> to vector<8x32xf32>
    %227 = math.tanh %226 : vector<8x32xf32>
    %228 = vector.extract_strided_slice %225 {offsets = [0, 0], sizes = [8, 32], strides = [1, 1]} : vector<8x96xf32> to vector<8x32xf32>
    %229 = vector.extract_strided_slice %225 {offsets = [0, 32], sizes = [8, 32], strides = [1, 1]} : vector<8x96xf32> to vector<8x32xf32>
    %230 = vector.extract_strided_slice %225 {offsets = [0, 64], sizes = [8, 32], strides = [1, 1]} : vector<8x96xf32> to vector<8x32xf32>
    %231 = arith.mulf %229, %193 : vector<8x32xf32>
    %232 = arith.mulf %228, %227 : vector<8x32xf32>
    %233 = arith.addf %231, %232 : vector<8x32xf32>
    %234 = math.tanh %233 : vector<8x32xf32>
    %235 = arith.mulf %230, %234 : vector<8x32xf32>
    %236 = tpu.concatenate %235, %215 in 1 : vector<8x32xf32>, vector<8x32xf32> -> vector<8x64xf32>
    %cst_33 = arith.constant dense<0.000000e+00> : vector<8x128xf32>
    %237 = tpu.matmul %236, %1, %cst_33 {dimension_numbers = #tpu.dot_dimension_numbers<[1], [0], [0], [1], [0, 0, 1, 1], [], []>} : vector<8x64xf32>, vector<64x128xf32>, vector<8x128xf32> -> vector<8x128xf32>
    %238 = vector.broadcast %2 : vector<1x128xf32> to vector<8x128xf32>
    %239 = arith.addf %237, %238 : vector<8x128xf32>
    %240 = vector.extract_strided_slice %239 {offsets = [0, 0], sizes = [8, 96], strides = [1, 1]} : vector<8x128xf32> to vector<8x96xf32>
    %241 = arith.negf %240 : vector<8x96xf32>
    %242 = math.exp %241 : vector<8x96xf32>
    %cst_34 = arith.constant 1.000000e+00 : f32
    %243 = vector.broadcast %cst_34 : f32 to vector<8x96xf32>
    %244 = arith.addf %243, %242 : vector<8x96xf32>
    %245 = arith.divf %243, %244 : vector<8x96xf32>
    %246 = vector.extract_strided_slice %239 {offsets = [0, 96], sizes = [8, 32], strides = [1, 1]} : vector<8x128xf32> to vector<8x32xf32>
    %247 = math.tanh %246 : vector<8x32xf32>
    %248 = vector.extract_strided_slice %245 {offsets = [0, 0], sizes = [8, 32], strides = [1, 1]} : vector<8x96xf32> to vector<8x32xf32>
    %249 = vector.extract_strided_slice %245 {offsets = [0, 32], sizes = [8, 32], strides = [1, 1]} : vector<8x96xf32> to vector<8x32xf32>
    %250 = vector.extract_strided_slice %245 {offsets = [0, 64], sizes = [8, 32], strides = [1, 1]} : vector<8x96xf32> to vector<8x32xf32>
    %251 = arith.mulf %249, %213 : vector<8x32xf32>
    %252 = arith.mulf %248, %247 : vector<8x32xf32>
    %253 = arith.addf %251, %252 : vector<8x32xf32>
    %254 = math.tanh %253 : vector<8x32xf32>
    %255 = arith.mulf %250, %254 : vector<8x32xf32>
    %256 = vector.extract_strided_slice %14 {offsets = [6, 0, 0], sizes = [1, 8, 128], strides = [1, 1, 1]} : vector<8x8x128xf32> to vector<1x8x128xf32>
    %257 = vector.shape_cast %256 : vector<1x8x128xf32> to vector<8x128xf32>
    %cst_35 = arith.constant dense<0.000000e+00> : vector<8x128xf32>
    %258 = tpu.matmul %235, %0, %cst_35 {dimension_numbers = #tpu.dot_dimension_numbers<[1], [0], [0], [1], [0, 0, 1, 1], [], []>} : vector<8x32xf32>, vector<32x128xf32>, vector<8x128xf32> -> vector<8x128xf32>
    %259 = arith.addf %257, %258 : vector<8x128xf32>
    %260 = vector.extract_strided_slice %259 {offsets = [0, 0], sizes = [8, 96], strides = [1, 1]} : vector<8x128xf32> to vector<8x96xf32>
    %261 = arith.negf %260 : vector<8x96xf32>
    %262 = math.exp %261 : vector<8x96xf32>
    %cst_36 = arith.constant 1.000000e+00 : f32
    %263 = vector.broadcast %cst_36 : f32 to vector<8x96xf32>
    %264 = arith.addf %263, %262 : vector<8x96xf32>
    %265 = arith.divf %263, %264 : vector<8x96xf32>
    %266 = vector.extract_strided_slice %259 {offsets = [0, 96], sizes = [8, 32], strides = [1, 1]} : vector<8x128xf32> to vector<8x32xf32>
    %267 = math.tanh %266 : vector<8x32xf32>
    %268 = vector.extract_strided_slice %265 {offsets = [0, 0], sizes = [8, 32], strides = [1, 1]} : vector<8x96xf32> to vector<8x32xf32>
    %269 = vector.extract_strided_slice %265 {offsets = [0, 32], sizes = [8, 32], strides = [1, 1]} : vector<8x96xf32> to vector<8x32xf32>
    %270 = vector.extract_strided_slice %265 {offsets = [0, 64], sizes = [8, 32], strides = [1, 1]} : vector<8x96xf32> to vector<8x32xf32>
    %271 = arith.mulf %269, %233 : vector<8x32xf32>
    %272 = arith.mulf %268, %267 : vector<8x32xf32>
    %273 = arith.addf %271, %272 : vector<8x32xf32>
    %274 = math.tanh %273 : vector<8x32xf32>
    %275 = arith.mulf %270, %274 : vector<8x32xf32>
    %276 = tpu.concatenate %275, %255 in 1 : vector<8x32xf32>, vector<8x32xf32> -> vector<8x64xf32>
    %cst_37 = arith.constant dense<0.000000e+00> : vector<8x128xf32>
    %277 = tpu.matmul %276, %1, %cst_37 {dimension_numbers = #tpu.dot_dimension_numbers<[1], [0], [0], [1], [0, 0, 1, 1], [], []>} : vector<8x64xf32>, vector<64x128xf32>, vector<8x128xf32> -> vector<8x128xf32>
    %278 = vector.broadcast %2 : vector<1x128xf32> to vector<8x128xf32>
    %279 = arith.addf %277, %278 : vector<8x128xf32>
    %280 = vector.extract_strided_slice %279 {offsets = [0, 0], sizes = [8, 96], strides = [1, 1]} : vector<8x128xf32> to vector<8x96xf32>
    %281 = arith.negf %280 : vector<8x96xf32>
    %282 = math.exp %281 : vector<8x96xf32>
    %cst_38 = arith.constant 1.000000e+00 : f32
    %283 = vector.broadcast %cst_38 : f32 to vector<8x96xf32>
    %284 = arith.addf %283, %282 : vector<8x96xf32>
    %285 = arith.divf %283, %284 : vector<8x96xf32>
    %286 = vector.extract_strided_slice %279 {offsets = [0, 96], sizes = [8, 32], strides = [1, 1]} : vector<8x128xf32> to vector<8x32xf32>
    %287 = math.tanh %286 : vector<8x32xf32>
    %288 = vector.extract_strided_slice %285 {offsets = [0, 0], sizes = [8, 32], strides = [1, 1]} : vector<8x96xf32> to vector<8x32xf32>
    %289 = vector.extract_strided_slice %285 {offsets = [0, 32], sizes = [8, 32], strides = [1, 1]} : vector<8x96xf32> to vector<8x32xf32>
    %290 = vector.extract_strided_slice %285 {offsets = [0, 64], sizes = [8, 32], strides = [1, 1]} : vector<8x96xf32> to vector<8x32xf32>
    %291 = arith.mulf %289, %253 : vector<8x32xf32>
    %292 = arith.mulf %288, %287 : vector<8x32xf32>
    %293 = arith.addf %291, %292 : vector<8x32xf32>
    %294 = math.tanh %293 : vector<8x32xf32>
    %295 = arith.mulf %290, %294 : vector<8x32xf32>
    %296 = vector.extract_strided_slice %14 {offsets = [7, 0, 0], sizes = [1, 8, 128], strides = [1, 1, 1]} : vector<8x8x128xf32> to vector<1x8x128xf32>
    %297 = vector.shape_cast %296 : vector<1x8x128xf32> to vector<8x128xf32>
    %cst_39 = arith.constant dense<0.000000e+00> : vector<8x128xf32>
    %298 = tpu.matmul %275, %0, %cst_39 {dimension_numbers = #tpu.dot_dimension_numbers<[1], [0], [0], [1], [0, 0, 1, 1], [], []>} : vector<8x32xf32>, vector<32x128xf32>, vector<8x128xf32> -> vector<8x128xf32>
    %299 = arith.addf %297, %298 : vector<8x128xf32>
    %300 = vector.extract_strided_slice %299 {offsets = [0, 0], sizes = [8, 96], strides = [1, 1]} : vector<8x128xf32> to vector<8x96xf32>
    %301 = arith.negf %300 : vector<8x96xf32>
    %302 = math.exp %301 : vector<8x96xf32>
    %cst_40 = arith.constant 1.000000e+00 : f32
    %303 = vector.broadcast %cst_40 : f32 to vector<8x96xf32>
    %304 = arith.addf %303, %302 : vector<8x96xf32>
    %305 = arith.divf %303, %304 : vector<8x96xf32>
    %306 = vector.extract_strided_slice %299 {offsets = [0, 96], sizes = [8, 32], strides = [1, 1]} : vector<8x128xf32> to vector<8x32xf32>
    %307 = math.tanh %306 : vector<8x32xf32>
    %308 = vector.extract_strided_slice %305 {offsets = [0, 0], sizes = [8, 32], strides = [1, 1]} : vector<8x96xf32> to vector<8x32xf32>
    %309 = vector.extract_strided_slice %305 {offsets = [0, 32], sizes = [8, 32], strides = [1, 1]} : vector<8x96xf32> to vector<8x32xf32>
    %310 = vector.extract_strided_slice %305 {offsets = [0, 64], sizes = [8, 32], strides = [1, 1]} : vector<8x96xf32> to vector<8x32xf32>
    %311 = arith.mulf %309, %273 : vector<8x32xf32>
    %312 = arith.mulf %308, %307 : vector<8x32xf32>
    %313 = arith.addf %311, %312 : vector<8x32xf32>
    %314 = math.tanh %313 : vector<8x32xf32>
    %315 = arith.mulf %310, %314 : vector<8x32xf32>
    %316 = tpu.concatenate %315, %295 in 1 : vector<8x32xf32>, vector<8x32xf32> -> vector<8x64xf32>
    %cst_41 = arith.constant dense<0.000000e+00> : vector<8x128xf32>
    %317 = tpu.matmul %316, %1, %cst_41 {dimension_numbers = #tpu.dot_dimension_numbers<[1], [0], [0], [1], [0, 0, 1, 1], [], []>} : vector<8x64xf32>, vector<64x128xf32>, vector<8x128xf32> -> vector<8x128xf32>
    %318 = vector.broadcast %2 : vector<1x128xf32> to vector<8x128xf32>
    %319 = arith.addf %317, %318 : vector<8x128xf32>
    %320 = vector.extract_strided_slice %319 {offsets = [0, 0], sizes = [8, 96], strides = [1, 1]} : vector<8x128xf32> to vector<8x96xf32>
    %321 = arith.negf %320 : vector<8x96xf32>
    %322 = math.exp %321 : vector<8x96xf32>
    %cst_42 = arith.constant 1.000000e+00 : f32
    %323 = vector.broadcast %cst_42 : f32 to vector<8x96xf32>
    %324 = arith.addf %323, %322 : vector<8x96xf32>
    %325 = arith.divf %323, %324 : vector<8x96xf32>
    %326 = vector.extract_strided_slice %319 {offsets = [0, 96], sizes = [8, 32], strides = [1, 1]} : vector<8x128xf32> to vector<8x32xf32>
    %327 = math.tanh %326 : vector<8x32xf32>
    %328 = vector.extract_strided_slice %325 {offsets = [0, 0], sizes = [8, 32], strides = [1, 1]} : vector<8x96xf32> to vector<8x32xf32>
    %329 = vector.extract_strided_slice %325 {offsets = [0, 32], sizes = [8, 32], strides = [1, 1]} : vector<8x96xf32> to vector<8x32xf32>
    %330 = vector.extract_strided_slice %325 {offsets = [0, 64], sizes = [8, 32], strides = [1, 1]} : vector<8x96xf32> to vector<8x32xf32>
    %331 = arith.mulf %329, %293 : vector<8x32xf32>
    %332 = arith.mulf %328, %327 : vector<8x32xf32>
    %333 = arith.addf %331, %332 : vector<8x32xf32>
    %334 = math.tanh %333 : vector<8x32xf32>
    %335 = arith.mulf %330, %334 : vector<8x32xf32>
    %c0_43 = arith.constant 0 : index
    %c0_44 = arith.constant 0 : index
    %336 = vector.load %arg6[%c0_43, %c0_44] : memref<32x128xf32, #tpu.memory_space<vmem>>, vector<32x128xf32>
    %cst_45 = arith.constant dense<0.000000e+00> : vector<8x128xf32>
    %337 = tpu.matmul %335, %336, %cst_45 {dimension_numbers = #tpu.dot_dimension_numbers<[1], [0], [0], [1], [0, 0, 1, 1], [], []>} : vector<8x32xf32>, vector<32x128xf32>, vector<8x128xf32> -> vector<8x128xf32>
    %c0_46 = arith.constant 0 : index
    %c0_47 = arith.constant 0 : index
    %338 = vector.load %arg7[%c0_46, %c0_47] : memref<1x128xf32, #tpu.memory_space<vmem>>, vector<1x128xf32>
    %339 = vector.broadcast %338 : vector<1x128xf32> to vector<8x128xf32>
    %340 = arith.addf %337, %339 : vector<8x128xf32>
    %c0_48 = arith.constant 0 : index
    %c0_49 = arith.constant 0 : index
    %341 = vector.load %arg8[%c0_48, %c0_49] : memref<8x128xf32, #tpu.memory_space<vmem>>, vector<8x128xf32>
    tpu.vector_store %arg8[%c0_48, %c0_49], %340 {strides = array<i32>} : memref<8x128xf32, #tpu.memory_space<vmem>>, vector<8x128xf32>,
    return
  }
}

</mosaic_0001>

<llo_original>
// kernel: tpu_custom_call.1
$region0: #{tpu_custom_call.1}
  #allocation0 [shape = 'u32[]', space=smem, size = 0x4, offset = 0x4, fixed_abs, tag = 'smem constant byte address 0x4 - core index']
  #allocation1 [shape = 'u32[144,128]{1,0:T(1,128)}', space=vmem, size = 0x12000, scoped, tag = 'internal scratch']
  %s0 = inlined_call_operand.hbm [shape: f32[8,8], index: 0, kind: input, shape index: {}]
  %s1 = inlined_call_operand.vmem [shape: f32[1,128], index: 1, kind: input, shape index: {}]
  %s2 = inlined_call_operand.hbm [shape: f32[32,128], index: 2, kind: input, shape index: {}]
  %s3 = inlined_call_operand.vmem [shape: f32[1,128], index: 3, kind: input, shape index: {}]
  %s4 = inlined_call_operand.hbm [shape: f32[64,128], index: 4, kind: input, shape index: {}]
  %s5 = inlined_call_operand.vmem [shape: f32[1,128], index: 5, kind: input, shape index: {}]
  %s6 = inlined_call_operand.hbm [shape: f32[32,128], index: 6, kind: input, shape index: {}]
  %s7 = inlined_call_operand.vmem [shape: f32[1,128], index: 7, kind: input, shape index: {}]
  %s8 = inlined_call_operand.hbm [shape: f32[8,128], index: 8, kind: output, shape index: {}]
  %s9 = sld [smem:[#allocation0]]
  $region58: #{tpu_custom_call.1} parent=0
    _
  %s11 = ssub.s32 1, %s9
  %s12 = scalar_select 0, %s11, %s9
  $region1: #{tpu_custom_call.1} parent=0
    #allocation2 [shape = 'u8[4096]{0}', space=vmem, size = 0x1000, scoped, tag = 'input window, operand 0, single buffered']
    #allocation3 [shape = 's32[1]{0}', space=sflag, size = 0x4, scoped, tag = 'scoped memory for tpu_custom_call.1']
    #allocation4 [shape = 's32[1]{0}', space=sflag, size = 0x4, scoped, tag = 'scoped memory for tpu_custom_call.1']
    #allocation5 [shape = 'u8[16384]{0}', space=vmem, size = 0x4000, scoped, tag = 'input window, operand 2, single buffered']
    #allocation6 [shape = 's32[1]{0}', space=sflag, size = 0x4, scoped, tag = 'scoped memory for tpu_custom_call.1']
    #allocation7 [shape = 'u8[32768]{0}', space=vmem, size = 0x8000, scoped, tag = 'input window, operand 4, single buffered']
    #allocation8 [shape = 'u8[16384]{0}', space=vmem, size = 0x4000, scoped, tag = 'input window, operand 6, single buffered']
    #allocation9 [shape = 's32[1]{0}', space=sflag, size = 0x4, scoped, tag = 'scoped memory for tpu_custom_call.1']
    #allocation10 [shape = 'u8[4096]{0}', space=vmem, size = 0x1000, scoped, tag = 'output window, operand 0, single buffered']
    %13 = vsyncpa [#allocation3], 0
    %14 = vsyncpa [#allocation6], 0
    %15 = vsyncpa [#allocation9], 0
    %16 = vsyncpa [#allocation4], 0
    // Predicated region
    $region2: #{tpu_custom_call.1} parent=1 // pred_check
      _
    $region3: #{tpu_custom_call.1} parent=1 // pred_check_branch
      %18 = sbr.rel (0) target = $region5
    $region4: #{tpu_custom_call.1} parent=1 // pred_region
      %s20 = ssub.s32 128, 128
      %21 = vsyncadd [#allocation3], %s20
      %s23 = sshll.u32 [#allocation2], 4
      %s24 = int_to_ptr.vmem [resolvable:$true] %s23
      %26 = dma.hbm_to_vmem [thread:$0]  %s0, 128, %s24, [#allocation3]
    $region5: #{tpu_custom_call.1} parent=1 // pred_fallthru
      _
    // Predicated region
    $region6: #{tpu_custom_call.1} parent=1 // pred_check
      _
    $region7: #{tpu_custom_call.1} parent=1 // pred_check_branch
      %28 = sbr.rel (0) target = $region9
    $region8: #{tpu_custom_call.1} parent=1 // pred_region
      _
    $region9: #{tpu_custom_call.1} parent=1 // pred_fallthru
      _
    // Predicated region
    $region10: #{tpu_custom_call.1} parent=1 // pred_check
      _
    $region11: #{tpu_custom_call.1} parent=1 // pred_check_branch
      %30 = sbr.rel (0) target = $region13
    $region12: #{tpu_custom_call.1} parent=1 // pred_region
      %s32 = ssub.s32 512, 512
      %33 = vsyncadd [#allocation6], %s32
      %s34 = sshll.u32 [#allocation5], 4
      %s35 = int_to_ptr.vmem [resolvable:$true] %s34
      %40 = dma.hbm_to_vmem [thread:$0]  %s2, 512, %s35, [#allocation6], 128, 128, 8
    $region13: #{tpu_custom_call.1} parent=1 // pred_fallthru
      _
    // Predicated region
    $region14: #{tpu_custom_call.1} parent=1 // pred_check
      _
    $region15: #{tpu_custom_call.1} parent=1 // pred_check_branch
      %42 = sbr.rel (0) target = $region17
    $region16: #{tpu_custom_call.1} parent=1 // pred_region
      _
    $region17: #{tpu_custom_call.1} parent=1 // pred_fallthru
      _
    // Predicated region
    $region18: #{tpu_custom_call.1} parent=1 // pred_check
      _
    $region19: #{tpu_custom_call.1} parent=1 // pred_check_branch
      %44 = sbr.rel (0) target = $region21
    $region20: #{tpu_custom_call.1} parent=1 // pred_region
      %s46 = ssub.s32 1024, 1024
      %47 = vsyncadd [#allocation6], %s46
      %s48 = sshll.u32 [#allocation7], 4
      %s49 = int_to_ptr.vmem [resolvable:$true] %s48
      %54 = dma.hbm_to_vmem [thread:$0]  %s4, 1024, %s49, [#allocation6], 128, 128, 8
    $region21: #{tpu_custom_call.1} parent=1 // pred_fallthru
      _
    // Predicated region
    $region22: #{tpu_custom_call.1} parent=1 // pred_check
      _
    $region23: #{tpu_custom_call.1} parent=1 // pred_check_branch
      %56 = sbr.rel (0) target = $region25
    $region24: #{tpu_custom_call.1} parent=1 // pred_region
      _
    $region25: #{tpu_custom_call.1} parent=1 // pred_fallthru
      _
    // Predicated region
    $region26: #{tpu_custom_call.1} parent=1 // pred_check
      _
    $region27: #{tpu_custom_call.1} parent=1 // pred_check_branch
      %58 = sbr.rel (0) target = $region29
    $region28: #{tpu_custom_call.1} parent=1 // pred_region
      %s60 = ssub.s32 512, 512
      %61 = vsyncadd [#allocation9], %s60
      %s62 = sshll.u32 [#allocation8], 4
      %s63 = int_to_ptr.vmem [resolvable:$true] %s62
      %68 = dma.hbm_to_vmem [thread:$0]  %s6, 512, %s63, [#allocation9], 128, 128, 8
    $region29: #{tpu_custom_call.1} parent=1 // pred_fallthru
      _
    // Predicated region
    $region30: #{tpu_custom_call.1} parent=1 // pred_check
      _
    $region31: #{tpu_custom_call.1} parent=1 // pred_check_branch
      %70 = sbr.rel (0) target = $region33
    $region32: #{tpu_custom_call.1} parent=1 // pred_region
      _
    $region33: #{tpu_custom_call.1} parent=1 // pred_fallthru
      _
    // Predicated region
    $region34: #{tpu_custom_call.1} parent=1 // pred_check
      _
    $region35: #{tpu_custom_call.1} parent=1 // pred_check_branch
      %72 = sbr.rel (0) target = $region37
    $region36: #{tpu_custom_call.1} parent=1 // pred_region
      %73 = dma.done [#allocation3], 128
    $region37: #{tpu_custom_call.1} parent=1 // pred_fallthru
      _
    // Predicated region
    $region38: #{tpu_custom_call.1} parent=1 // pred_check
      _
    $region39: #{tpu_custom_call.1} parent=1 // pred_check_branch
      %75 = sbr.rel (0) target = $region41
    $region40: #{tpu_custom_call.1} parent=1 // pred_region
      %76 = dma.done [#allocation6], 512
    $region41: #{tpu_custom_call.1} parent=1 // pred_fallthru
      _
    // Predicated region
    $region42: #{tpu_custom_call.1} parent=1 // pred_check
      _
    $region43: #{tpu_custom_call.1} parent=1 // pred_check_branch
      %78 = sbr.rel (0) target = $region45
    $region44: #{tpu_custom_call.1} parent=1 // pred_region
      %79 = dma.done [#allocation6], 1024
    $region45: #{tpu_custom_call.1} parent=1 // pred_fallthru
      _
    // Predicated region
    $region46: #{tpu_custom_call.1} parent=1 // pred_check
      _
    $region47: #{tpu_custom_call.1} parent=1 // pred_check_branch
      %81 = sbr.rel (0) target = $region49
    $region48: #{tpu_custom_call.1} parent=1 // pred_region
      %82 = dma.done [#allocation9], 512
    $region49: #{tpu_custom_call.1} parent=1 // pred_fallthru
      _
    %v83 = vld [vmem:[#allocation5] sm:$0xff]
    %v84 = vld [vmem:[#allocation5 + $0x8] sm:$0xff]
    %v85 = vld [vmem:[#allocation5 + $0x10] sm:$0xff]
    %v86 = vld [vmem:[#allocation5 + $0x18] sm:$0xff]
    %v87 = vld [vmem:[#allocation7] sm:$0xff]
    %v88 = vld [vmem:[#allocation7 + $0x8] sm:$0xff]
    %v89 = vld [vmem:[#allocation7 + $0x10] sm:$0xff]
    %v90 = vld [vmem:[#allocation7 + $0x18] sm:$0xff]
    %v91 = vld [vmem:[#allocation7 + $0x20] sm:$0xff]
    %v92 = vld [vmem:[#allocation7 + $0x28] sm:$0xff]
    %v93 = vld [vmem:[#allocation7 + $0x30] sm:$0xff]
    %v94 = vld [vmem:[#allocation7 + $0x38] sm:$0xff]
    %v95 = vld [vmem:[%s5] sm:$0x1]
    %v96 = vld [vmem:[#allocation2] sm:$0xff]
    %97 = vxpose.xlu0.b32.start [1/16] %v96, 128
    %98 = vxpose.xlu0.b32.cont [2/16] 0.0, 128
    %99 = vxpose.xlu0.b32.cont [3/16] 0.0, 128
    %100 = vxpose.xlu0.b32.cont [4/16] 0.0, 128
    %101 = vxpose.xlu0.b32.cont [5/16] 0.0, 128
    %102 = vxpose.xlu0.b32.cont [6/16] 0.0, 128
    %103 = vxpose.xlu0.b32.cont [7/16] 0.0, 128
    %104 = vxpose.xlu0.b32.cont [8/16] 0.0, 128
    %105 = vxpose.xlu0.b32.cont [9/16] 0.0, 128
    %106 = vxpose.xlu0.b32.cont [10/16] 0.0, 128
    %107 = vxpose.xlu0.b32.cont [11/16] 0.0, 128
    %108 = vxpose.xlu0.b32.cont [12/16] 0.0, 128
    %109 = vxpose.xlu0.b32.cont [13/16] 0.0, 128
    %110 = vxpose.xlu0.b32.cont [14/16] 0.0, 128
    %111 = vxpose.xlu0.b32.cont [15/16] 0.0, 128
    %112 = vxpose.xlu0.b32.end [16/16] 0.0, 128
    %v113 = vpop.trf.xlu0
    %v114 = vpop.trf.xlu0
    %v115 = vpop.trf.xlu0
    %v116 = vpop.trf.xlu0
    %v117 = vpop.trf.xlu0
    %v118 = vpop.trf.xlu0
    %v119 = vpop.trf.xlu0
    %v120 = vpop.trf.xlu0
    %v121 = vpop.trf.xlu0
    %v122 = vpop.trf.xlu0
    %v123 = vpop.trf.xlu0
    %v124 = vpop.trf.xlu0
    %v125 = vpop.trf.xlu0
    %v126 = vpop.trf.xlu0
    %v127 = vpop.trf.xlu0
    %v128 = vpop.trf.xlu0
    %v129 = vlaneseq
    %v130 = vshrl.u32 %v129, 7
    %v131 = vsub.s32 0, %v130
    %v132 = vrot.slane %v113, %v131
    %134 = vbcast.lane.b32.xlu0 %v132, 256
    %v135 = vpop.permute.xlu0 %134
    %v136 = vlaneseq
    %v137 = vshrl.u32 %v136, 7
    %v138 = vsub.s32 1, %v137
    %v139 = vrot.slane %v113, %v138
    %141 = vbcast.lane.b32.xlu0 %v139, 256
    %v142 = vpop.permute.xlu0 %141
    %v143 = vlaneseq
    %v144 = vshrl.u32 %v143, 7
    %v145 = vsub.s32 2, %v144
    %v146 = vrot.slane %v113, %v145
    %148 = vbcast.lane.b32.xlu0 %v146, 256
    %v149 = vpop.permute.xlu0 %148
    %v150 = vlaneseq
    %v151 = vshrl.u32 %v150, 7
    %v152 = vsub.s32 3, %v151
    %v153 = vrot.slane %v113, %v152
    %155 = vbcast.lane.b32.xlu0 %v153, 256
    %v156 = vpop.permute.xlu0 %155
    %v157 = vlaneseq
    %v158 = vshrl.u32 %v157, 7
    %v159 = vsub.s32 4, %v158
    %v160 = vrot.slane %v113, %v159
    %162 = vbcast.lane.b32.xlu0 %v160, 256
    %v163 = vpop.permute.xlu0 %162
    %v164 = vlaneseq
    %v165 = vshrl.u32 %v164, 7
    %v166 = vsub.s32 5, %v165
    %v167 = vrot.slane %v113, %v166
    %169 = vbcast.lane.b32.xlu0 %v167, 256
    %v170 = vpop.permute.xlu0 %169
    %v171 = vlaneseq
    %v172 = vshrl.u32 %v171, 7
    %v173 = vsub.s32 6, %v172
    %v174 = vrot.slane %v113, %v173
    %176 = vbcast.lane.b32.xlu0 %v174, 256
    %v177 = vpop.permute.xlu0 %176
    %v178 = vlaneseq
    %v179 = vshrl.u32 %v178, 7
    %v180 = vsub.s32 7, %v179
    %v181 = vrot.slane %v113, %v180
    %183 = vbcast.lane.b32.xlu0 %v181, 256
    %v184 = vpop.permute.xlu0 %183
    %v185 = vld [vmem:[%s1] sm:$0x1]
    %v187 = vlaneseq
    %v188 = vshrl.u32 %v187, 7
    %v189 = vsub.s32 0, %v188
    %v190 = vrot.slane %v185, %v189
    %v192 = vmul.f32 %v135, %v190
    %v193 = vmul.f32 %v142, %v190
    %v194 = vmul.f32 %v149, %v190
    %v195 = vmul.f32 %v156, %v190
    %v196 = vmul.f32 %v163, %v190
    %v197 = vmul.f32 %v170, %v190
    %v198 = vmul.f32 %v177, %v190
    %v199 = vmul.f32 %v184, %v190
    %v200 = vld [vmem:[%s3] sm:$0x1]
    %v202 = vlaneseq
    %v203 = vshrl.u32 %v202, 7
    %v204 = vsub.s32 0, %v203
    %v205 = vrot.slane %v200, %v204
    %v207 = vadd.f32 %v192, %v205
    %v208 = vadd.f32 %v193, %v205
    %v209 = vadd.f32 %v194, %v205
    %v210 = vadd.f32 %v195, %v205
    %v211 = vadd.f32 %v196, %v205
    %v212 = vadd.f32 %v197, %v205
    %v213 = vadd.f32 %v198, %v205
    %v214 = vadd.f32 %v199, %v205
    %vm215 = vcmask 261120
    %v217 = vsel %vm215, 0.0, 0
    %219 = vmatprep.subr.mxu0 0.0
    %220 = vmatpush1.msra.mxu0 %v83
    %221 = vmatprep.subr.mxu0 0.0
    %222 = vmatpush1.msra.mxu0 %v84
    %223 = vmatprep.subr.mxu0 0.0
    %224 = vmatpush1.msra.mxu0 %v85
    %225 = vmatprep.subr.mxu0 0.0
    %226 = vmatpush1.msra.mxu0 %v86
    %227 = vmatprep.subr.mxu0 0.0
    %228 = vmatpush1.msra.mxu0 0.0
    %229 = vmatprep.subr.mxu0 0.0
    %230 = vmatpush1.msra.mxu0 0.0
    %231 = vmatprep.subr.mxu0 0.0
    %232 = vmatpush1.msra.mxu0 0.0
    %233 = vmatprep.subr.mxu0 0.0
    %234 = vmatpush1.msra.mxu0 0.0
    %235 = vmatprep.subr.mxu0 0.0
    %236 = vmatpush1.msra.mxu0 0.0
    %237 = vmatprep.subr.mxu0 0.0
    %238 = vmatpush1.msra.mxu0 0.0
    %239 = vmatprep.subr.mxu0 0.0
    %240 = vmatpush1.msra.mxu0 0.0
    %241 = vmatprep.subr.mxu0 0.0
    %242 = vmatpush1.msra.mxu0 0.0
    %243 = vmatprep.subr.mxu0 0.0
    %244 = vmatpush1.msra.mxu0 0.0
    %245 = vmatprep.subr.mxu0 0.0
    %246 = vmatpush1.msra.mxu0 0.0
    %247 = vmatprep.subr.mxu0 0.0
    %248 = vmatpush1.msra.mxu0 0.0
    %249 = vmatprep.subr.mxu0 0.0
    %250 = vmatpush1.msra.mxu0 0.0
    %251 = vmatprep.subr.mxu0 0.0
    %252 = vmatpush1.msra.mxu0 0.0
    %253 = vmatprep.subr.mxu0 0.0
    %254 = vmatpush1.msra.mxu0 0.0
    %255 = vmatprep.subr.mxu0 0.0
    %256 = vmatpush1.msra.mxu0 0.0
    %257 = vmatprep.subr.mxu0 0.0
    %258 = vmatpush1.msra.mxu0 0.0
    %259 = vmatprep.subr.mxu0 0.0
    %260 = vmatpush1.msra.mxu0 0.0
    %261 = vmatprep.subr.mxu0 0.0
    %262 = vmatpush1.msra.mxu0 0.0
    %263 = vmatprep.subr.mxu0 0.0
    %264 = vmatpush1.msra.mxu0 0.0
    %265 = vmatprep.subr.mxu0 0.0
    %266 = vmatpush1.msra.mxu0 0.0
    %267 = vmatprep.subr.mxu0 0.0
    %268 = vmatpush1.msra.mxu0 0.0
    %269 = vmatprep.subr.mxu0 0.0
    %270 = vmatpush1.msra.mxu0 0.0
    %271 = vmatprep.subr.mxu0 0.0
    %272 = vmatpush1.msra.mxu0 0.0
    %273 = vmatprep.subr.mxu0 0.0
    %274 = vmatpush1.msra.mxu0 0.0
    %275 = vmatprep.subr.mxu0 0.0
    %276 = vmatpush1.msra.mxu0 0.0
    %277 = vmatprep.subr.mxu0 0.0
    %278 = vmatpush1.msra.mxu0 0.0
    %279 = vmatprep.subr.mxu0 0.0
    %280 = vmatpush1.msra.mxu0 0.0
    %281 = vmatprep.subr.mxu0 0.0
    %282 = vmatpush1.msra.mxu0 0.0
    %283 = vmatprep.mubr.f32.mxu0 0.0
    %284 = vmatmul.mubr.f32.gmra.mrb[0].mxu0 %v217
    %v285 = vpop.f32.mrb[0].mxu0
    %v286 = vadd.f32 0.0, %v285
    %v287 = vpop.f32.mrb[0].mxu0
    %288 = vdwg.mxu0
    %v289 = vadd.f32 %v207, %v286
    %v290 = vxor.u32 %v289, 2147483648
    %v291 = vmul.f32 %v290, 1.442695
    %v292 = vpow.pop %v291
    %v293 = vadd.f32 %v292, 1.0
    %v294 = vrcp.pop %v293
    %v295 = vmul.f32 1.0, %v294
    %v296 = vtanh.pop %v289
    %v297 = vmul.f32 %v295, 0.0
    %299 = vrot.lane.b32.xlu0 %v296, 32
    %v300 = vpop.permute.xlu0 %299
    %v302 = vmul.f32 %v295, %v300
    %304 = vrot.lane.b32.xlu0 %v302, 32
    %v305 = vpop.permute.xlu0 %304
    %v307 = vadd.f32 %v297, %v305
    %v308 = vtanh.pop %v307
    %310 = vrot.lane.b32.xlu0 %v308, 32
    %v311 = vpop.permute.xlu0 %310
    %v313 = vmul.f32 %v295, %v311
    %315 = vrot.lane.b32.xlu0 %v313, 64
    %v316 = vpop.permute.xlu0 %315
    %v318 = vsel %vm215, %v316, 0.0
    %v320 = vlaneseq
    %v321 = vshrl.u32 %v320, 7
    %v322 = vsub.s32 0, %v321
    %v323 = vrot.slane %v95, %v322
    %vm325 = vcmask 523264
    %v327 = vsel %vm325, %v318, 0
    %329 = vmatprep.subr.mxu0 0.0
    %330 = vmatpush1.msra.mxu0 %v87
    %331 = vmatprep.subr.mxu0 0.0
    %332 = vmatpush1.msra.mxu0 %v88
    %333 = vmatprep.subr.mxu0 0.0
    %334 = vmatpush1.msra.mxu0 %v89
    %335 = vmatprep.subr.mxu0 0.0
    %336 = vmatpush1.msra.mxu0 %v90
    %337 = vmatprep.subr.mxu0 0.0
    %338 = vmatpush1.msra.mxu0 %v91
    %339 = vmatprep.subr.mxu0 0.0
    %340 = vmatpush1.msra.mxu0 %v92
    %341 = vmatprep.subr.mxu0 0.0
    %342 = vmatpush1.msra.mxu0 %v93
    %343 = vmatprep.subr.mxu0 0.0
    %344 = vmatpush1.msra.mxu0 %v94
    %345 = vmatprep.subr.mxu0 0.0
    %346 = vmatpush1.msra.mxu0 0.0
    %347 = vmatprep.subr.mxu0 0.0
    %348 = vmatpush1.msra.mxu0 0.0
    %349 = vmatprep.subr.mxu0 0.0
    %350 = vmatpush1.msra.mxu0 0.0
    %351 = vmatprep.subr.mxu0 0.0
    %352 = vmatpush1.msra.mxu0 0.0
    %353 = vmatprep.subr.mxu0 0.0
    %354 = vmatpush1.msra.mxu0 0.0
    %355 = vmatprep.subr.mxu0 0.0
    %356 = vmatpush1.msra.mxu0 0.0
    %357 = vmatprep.subr.mxu0 0.0
    %358 = vmatpush1.msra.mxu0 0.0
    %359 = vmatprep.subr.mxu0 0.0
    %360 = vmatpush1.msra.mxu0 0.0
    %361 = vmatprep.subr.mxu0 0.0
    %362 = vmatpush1.msra.mxu0 0.0
    %363 = vmatprep.subr.mxu0 0.0
    %364 = vmatpush1.msra.mxu0 0.0
    %365 = vmatprep.subr.mxu0 0.0
    %366 = vmatpush1.msra.mxu0 0.0
    %367 = vmatprep.subr.mxu0 0.0
    %368 = vmatpush1.msra.mxu0 0.0
    %369 = vmatprep.subr.mxu0 0.0
    %370 = vmatpush1.msra.mxu0 0.0
    %371 = vmatprep.subr.mxu0 0.0
    %372 = vmatpush1.msra.mxu0 0.0
    %373 = vmatprep.subr.mxu0 0.0
    %374 = vmatpush1.msra.mxu0 0.0
    %375 = vmatprep.subr.mxu0 0.0
    %376 = vmatpush1.msra.mxu0 0.0
    %377 = vmatprep.subr.mxu0 0.0
    %378 = vmatpush1.msra.mxu0 0.0
    %379 = vmatprep.subr.mxu0 0.0
    %380 = vmatpush1.msra.mxu0 0.0
    %381 = vmatprep.subr.mxu0 0.0
    %382 = vmatpush1.msra.mxu0 0.0
    %383 = vmatprep.subr.mxu0 0.0
    %384 = vmatpush1.msra.mxu0 0.0
    %385 = vmatprep.subr.mxu0 0.0
    %386 = vmatpush1.msra.mxu0 0.0
    %387 = vmatprep.subr.mxu0 0.0
    %388 = vmatpush1.msra.mxu0 0.0
    %389 = vmatprep.subr.mxu0 0.0
    %390 = vmatpush1.msra.mxu0 0.0
    %391 = vmatprep.subr.mxu0 0.0
    %392 = vmatpush1.msra.mxu0 0.0
    %393 = vmatprep.mubr.f32.mxu0 0.0
    %394 = vmatmul.mubr.f32.gmra.mrb[0].mxu0 %v327
    %v395 = vpop.f32.mrb[0].mxu0
    %v396 = vadd.f32 %v323, %v395
    %v397 = vpop.f32.mrb[0].mxu0
    %398 = vdwg.mxu0
    %v399 = vxor.u32 %v396, 2147483648
    %v400 = vmul.f32 %v399, 1.442695
    %v401 = vpow.pop %v400
    %v402 = vadd.f32 %v401, 1.0
    %v403 = vrcp.pop %v402
    %v404 = vmul.f32 1.0, %v403
    %v405 = vtanh.pop %v396
    %v406 = vmul.f32 %v404, 0.0
    %408 = vrot.lane.b32.xlu0 %v405, 32
    %v409 = vpop.permute.xlu0 %408
    %v411 = vmul.f32 %v404, %v409
    %413 = vrot.lane.b32.xlu0 %v411, 32
    %v414 = vpop.permute.xlu0 %413
    %v416 = vadd.f32 %v406, %v414
    %v417 = vtanh.pop %v416
    %419 = vrot.lane.b32.xlu0 %v417, 32
    %v420 = vpop.permute.xlu0 %419
    %v422 = vmul.f32 %v404, %v420
    %v423 = vsel %vm215, %v316, 0
    %425 = vmatprep.subr.mxu0 0.0
    %426 = vmatpush1.msra.mxu0 %v83
    %427 = vmatprep.subr.mxu0 0.0
    %428 = vmatpush1.msra.mxu0 %v84
    %429 = vmatprep.subr.mxu0 0.0
    %430 = vmatpush1.msra.mxu0 %v85
    %431 = vmatprep.subr.mxu0 0.0
    %432 = vmatpush1.msra.mxu0 %v86
    %433 = vmatprep.subr.mxu0 0.0
    %434 = vmatpush1.msra.mxu0 0.0
    %435 = vmatprep.subr.mxu0 0.0
    %436 = vmatpush1.msra.mxu0 0.0
    %437 = vmatprep.subr.mxu0 0.0
    %438 = vmatpush1.msra.mxu0 0.0
    %439 = vmatprep.subr.mxu0 0.0
    %440 = vmatpush1.msra.mxu0 0.0
    %441 = vmatprep.subr.mxu0 0.0
    %442 = vmatpush1.msra.mxu0 0.0
    %443 = vmatprep.subr.mxu0 0.0
    %444 = vmatpush1.msra.mxu0 0.0
    %445 = vmatprep.subr.mxu0 0.0
    %446 = vmatpush1.msra.mxu0 0.0
    %447 = vmatprep.subr.mxu0 0.0
    %448 = vmatpush1.msra.mxu0 0.0
    %449 = vmatprep.subr.mxu0 0.0
    %450 = vmatpush1.msra.mxu0 0.0
    %451 = vmatprep.subr.mxu0 0.0
    %452 = vmatpush1.msra.mxu0 0.0
    %453 = vmatprep.subr.mxu0 0.0
    %454 = vmatpush1.msra.mxu0 0.0
    %455 = vmatprep.subr.mxu0 0.0
    %456 = vmatpush1.msra.mxu0 0.0
    %457 = vmatprep.subr.mxu0 0.0
    %458 = vmatpush1.msra.mxu0 0.0
    %459 = vmatprep.subr.mxu0 0.0
    %460 = vmatpush1.msra.mxu0 0.0
    %461 = vmatprep.subr.mxu0 0.0
    %462 = vmatpush1.msra.mxu0 0.0
    %463 = vmatprep.subr.mxu0 0.0
    %464 = vmatpush1.msra.mxu0 0.0
    %465 = vmatprep.subr.mxu0 0.0
    %466 = vmatpush1.msra.mxu0 0.0
    %467 = vmatprep.subr.mxu0 0.0
    %468 = vmatpush1.msra.mxu0 0.0
    %469 = vmatprep.subr.mxu0 0.0
    %470 = vmatpush1.msra.mxu0 0.0
    %471 = vmatprep.subr.mxu0 0.0
    %472 = vmatpush1.msra.mxu0 0.0
    %473 = vmatprep.subr.mxu0 0.0
    %474 = vmatpush1.msra.mxu0 0.0
    %475 = vmatprep.subr.mxu0 0.0
    %476 = vmatpush1.msra.mxu0 0.0
    %477 = vmatprep.subr.mxu0 0.0
    %478 = vmatpush1.msra.mxu0 0.0
    %479 = vmatprep.subr.mxu0 0.0
    %480 = vmatpush1.msra.mxu0 0.0
    %481 = vmatprep.subr.mxu0 0.0
    %482 = vmatpush1.msra.mxu0 0.0
    %483 = vmatprep.subr.mxu0 0.0
    %484 = vmatpush1.msra.mxu0 0.0
    %485 = vmatprep.subr.mxu0 0.0
    %486 = vmatpush1.msra.mxu0 0.0
    %487 = vmatprep.subr.mxu0 0.0
    %488 = vmatpush1.msra.mxu0 0.0
    %489 = vmatprep.mubr.f32.mxu0 0.0
    %490 = vmatmul.mubr.f32.gmra.mrb[0].mxu0 %v423
    %v491 = vpop.f32.mrb[0].mxu0
    %v492 = vadd.f32 0.0, %v491
    %v493 = vpop.f32.mrb[0].mxu0
    %494 = vdwg.mxu0
    %v495 = vadd.f32 %v208, %v492
    %v496 = vxor.u32 %v495, 2147483648
    %v497 = vmul.f32 %v496, 1.442695
    %v498 = vpow.pop %v497
    %v499 = vadd.f32 %v498, 1.0
    %v500 = vrcp.pop %v499
    %v501 = vmul.f32 1.0, %v500
    %v502 = vtanh.pop %v495
    %v503 = vmul.f32 %v501, %v307
    %505 = vrot.lane.b32.xlu0 %v502, 32
    %v506 = vpop.permute.xlu0 %505
    %v508 = vmul.f32 %v501, %v506
    %510 = vrot.lane.b32.xlu0 %v508, 32
    %v511 = vpop.permute.xlu0 %510
    %v513 = vadd.f32 %v503, %v511
    %v514 = vtanh.pop %v513
    %516 = vrot.lane.b32.xlu0 %v514, 32
    %v517 = vpop.permute.xlu0 %516
    %v519 = vmul.f32 %v501, %v517
    %521 = vrot.lane.b32.xlu0 %v519, 64
    %v522 = vpop.permute.xlu0 %521
    %525 = vrot.lane.b32.xlu0 %v422, 96
    %v526 = vpop.permute.xlu0 %525
    %v528 = vsel %vm215, %v522, %v526
    %v530 = vsel %vm325, %v528, 0
    %532 = vmatprep.subr.mxu0 0.0
    %533 = vmatpush1.msra.mxu0 %v87
    %534 = vmatprep.subr.mxu0 0.0
    %535 = vmatpush1.msra.mxu0 %v88
    %536 = vmatprep.subr.mxu0 0.0
    %537 = vmatpush1.msra.mxu0 %v89
    %538 = vmatprep.subr.mxu0 0.0
    %539 = vmatpush1.msra.mxu0 %v90
    %540 = vmatprep.subr.mxu0 0.0
    %541 = vmatpush1.msra.mxu0 %v91
    %542 = vmatprep.subr.mxu0 0.0
    %543 = vmatpush1.msra.mxu0 %v92
    %544 = vmatprep.subr.mxu0 0.0
    %545 = vmatpush1.msra.mxu0 %v93
    %546 = vmatprep.subr.mxu0 0.0
    %547 = vmatpush1.msra.mxu0 %v94
    %548 = vmatprep.subr.mxu0 0.0
    %549 = vmatpush1.msra.mxu0 0.0
    %550 = vmatprep.subr.mxu0 0.0
    %551 = vmatpush1.msra.mxu0 0.0
    %552 = vmatprep.subr.mxu0 0.0
    %553 = vmatpush1.msra.mxu0 0.0
    %554 = vmatprep.subr.mxu0 0.0
    %555 = vmatpush1.msra.mxu0 0.0
    %556 = vmatprep.subr.mxu0 0.0
    %557 = vmatpush1.msra.mxu0 0.0
    %558 = vmatprep.subr.mxu0 0.0
    %559 = vmatpush1.msra.mxu0 0.0
    %560 = vmatprep.subr.mxu0 0.0
    %561 = vmatpush1.msra.mxu0 0.0
    %562 = vmatprep.subr.mxu0 0.0
    %563 = vmatpush1.msra.mxu0 0.0
    %564 = vmatprep.subr.mxu0 0.0
    %565 = vmatpush1.msra.mxu0 0.0
    %566 = vmatprep.subr.mxu0 0.0
    %567 = vmatpush1.msra.mxu0 0.0
    %568 = vmatprep.subr.mxu0 0.0
    %569 = vmatpush1.msra.mxu0 0.0
    %570 = vmatprep.subr.mxu0 0.0
    %571 = vmatpush1.msra.mxu0 0.0
    %572 = vmatprep.subr.mxu0 0.0
    %573 = vmatpush1.msra.mxu0 0.0
    %574 = vmatprep.subr.mxu0 0.0
    %575 = vmatpush1.msra.mxu0 0.0
    %576 = vmatprep.subr.mxu0 0.0
    %577 = vmatpush1.msra.mxu0 0.0
    %578 = vmatprep.subr.mxu0 0.0
    %579 = vmatpush1.msra.mxu0 0.0
    %580 = vmatprep.subr.mxu0 0.0
    %581 = vmatpush1.msra.mxu0 0.0
    %582 = vmatprep.subr.mxu0 0.0
    %583 = vmatpush1.msra.mxu0 0.0
    %584 = vmatprep.subr.mxu0 0.0
    %585 = vmatpush1.msra.mxu0 0.0
    %586 = vmatprep.subr.mxu0 0.0
    %587 = vmatpush1.msra.mxu0 0.0
    %588 = vmatprep.subr.mxu0 0.0
    %589 = vmatpush1.msra.mxu0 0.0
    %590 = vmatprep.subr.mxu0 0.0
    %591 = vmatpush1.msra.mxu0 0.0
    %592 = vmatprep.subr.mxu0 0.0
    %593 = vmatpush1.msra.mxu0 0.0
    %594 = vmatprep.subr.mxu0 0.0
    %595 = vmatpush1.msra.mxu0 0.0
    %596 = vmatprep.mubr.f32.mxu0 0.0
    %597 = vmatmul.mubr.f32.gmra.mrb[0].mxu0 %v530
    %v598 = vpop.f32.mrb[0].mxu0
    %v599 = vadd.f32 %v323, %v598
    %v600 = vpop.f32.mrb[0].mxu0
    %601 = vdwg.mxu0
    %v602 = vxor.u32 %v599, 2147483648
    %v603 = vmul.f32 %v602, 1.442695
    %v604 = vpow.pop %v603
    %v605 = vadd.f32 %v604, 1.0
    %v606 = vrcp.pop %v605
    %v607 = vmul.f32 1.0, %v606
    %v608 = vtanh.pop %v599
    %v609 = vmul.f32 %v607, %v416
    %611 = vrot.lane.b32.xlu0 %v608, 32
    %v612 = vpop.permute.xlu0 %611
    %v614 = vmul.f32 %v607, %v612
    %616 = vrot.lane.b32.xlu0 %v614, 32
    %v617 = vpop.permute.xlu0 %616
    %v619 = vadd.f32 %v609, %v617
    %v620 = vtanh.pop %v619
    %622 = vrot.lane.b32.xlu0 %v620, 32
    %v623 = vpop.permute.xlu0 %622
    %v625 = vmul.f32 %v607, %v623
    %v626 = vsel %vm215, %v522, 0
    %628 = vmatprep.subr.mxu0 0.0
    %629 = vmatpush1.msra.mxu0 %v83
    %630 = vmatprep.subr.mxu0 0.0
    %631 = vmatpush1.msra.mxu0 %v84
    %632 = vmatprep.subr.mxu0 0.0
    %633 = vmatpush1.msra.mxu0 %v85
    %634 = vmatprep.subr.mxu0 0.0
    %635 = vmatpush1.msra.mxu0 %v86
    %636 = vmatprep.subr.mxu0 0.0
    %637 = vmatpush1.msra.mxu0 0.0
    %638 = vmatprep.subr.mxu0 0.0
    %639 = vmatpush1.msra.mxu0 0.0
    %640 = vmatprep.subr.mxu0 0.0
    %641 = vmatpush1.msra.mxu0 0.0
    %642 = vmatprep.subr.mxu0 0.0
    %643 = vmatpush1.msra.mxu0 0.0
    %644 = vmatprep.subr.mxu0 0.0
    %645 = vmatpush1.msra.mxu0 0.0
    %646 = vmatprep.subr.mxu0 0.0
    %647 = vmatpush1.msra.mxu0 0.0
    %648 = vmatprep.subr.mxu0 0.0
    %649 = vmatpush1.msra.mxu0 0.0
    %650 = vmatprep.subr.mxu0 0.0
    %651 = vmatpush1.msra.mxu0 0.0
    %652 = vmatprep.subr.mxu0 0.0
    %653 = vmatpush1.msra.mxu0 0.0
    %654 = vmatprep.subr.mxu0 0.0
    %655 = vmatpush1.msra.mxu0 0.0
    %656 = vmatprep.subr.mxu0 0.0
    %657 = vmatpush1.msra.mxu0 0.0
    %658 = vmatprep.subr.mxu0 0.0
    %659 = vmatpush1.msra.mxu0 0.0
    %660 = vmatprep.subr.mxu0 0.0
    %661 = vmatpush1.msra.mxu0 0.0
    %662 = vmatprep.subr.mxu0 0.0
    %663 = vmatpush1.msra.mxu0 0.0
    %664 = vmatprep.subr.mxu0 0.0
    %665 = vmatpush1.msra.mxu0 0.0
    %666 = vmatprep.subr.mxu0 0.0
    %667 = vmatpush1.msra.mxu0 0.0
    %668 = vmatprep.subr.mxu0 0.0
    %669 = vmatpush1.msra.mxu0 0.0
    %670 = vmatprep.subr.mxu0 0.0
    %671 = vmatpush1.msra.mxu0 0.0
    %672 = vmatprep.subr.mxu0 0.0
    %673 = vmatpush1.msra.mxu0 0.0
    %674 = vmatprep.subr.mxu0 0.0
    %675 = vmatpush1.msra.mxu0 0.0
    %676 = vmatprep.subr.mxu0 0.0
    %677 = vmatpush1.msra.mxu0 0.0
    %678 = vmatprep.subr.mxu0 0.0
    %679 = vmatpush1.msra.mxu0 0.0
    %680 = vmatprep.subr.mxu0 0.0
    %681 = vmatpush1.msra.mxu0 0.0
    %682 = vmatprep.subr.mxu0 0.0
    %683 = vmatpush1.msra.mxu0 0.0
    %684 = vmatprep.subr.mxu0 0.0
    %685 = vmatpush1.msra.mxu0 0.0
    %686 = vmatprep.subr.mxu0 0.0
    %687 = vmatpush1.msra.mxu0 0.0
    %688 = vmatprep.subr.mxu0 0.0
    %689 = vmatpush1.msra.mxu0 0.0
    %690 = vmatprep.subr.mxu0 0.0
    %691 = vmatpush1.msra.mxu0 0.0
    %692 = vmatprep.mubr.f32.mxu0 0.0
    %693 = vmatmul.mubr.f32.gmra.mrb[0].mxu0 %v626
    %v694 = vpop.f32.mrb[0].mxu0
    %v695 = vadd.f32 0.0, %v694
    %v696 = vpop.f32.mrb[0].mxu0
    %697 = vdwg.mxu0
    %v698 = vadd.f32 %v209, %v695
    %v699 = vxor.u32 %v698, 2147483648
    %v700 = vmul.f32 %v699, 1.442695
    %v701 = vpow.pop %v700
    %v702 = vadd.f32 %v701, 1.0
    %v703 = vrcp.pop %v702
    %v704 = vmul.f32 1.0, %v703
    %v705 = vtanh.pop %v698
    %v706 = vmul.f32 %v704, %v513
    %708 = vrot.lane.b32.xlu0 %v705, 32
    %v709 = vpop.permute.xlu0 %708
    %v711 = vmul.f32 %v704, %v709
    %713 = vrot.lane.b32.xlu0 %v711, 32
    %v714 = vpop.permute.xlu0 %713
    %v716 = vadd.f32 %v706, %v714
    %v717 = vtanh.pop %v716
    %719 = vrot.lane.b32.xlu0 %v717, 32
    %v720 = vpop.permute.xlu0 %719
    %v722 = vmul.f32 %v704, %v720
    %724 = vrot.lane.b32.xlu0 %v722, 64
    %v725 = vpop.permute.xlu0 %724
    %728 = vrot.lane.b32.xlu0 %v625, 96
    %v729 = vpop.permute.xlu0 %728
    %v731 = vsel %vm215, %v725, %v729
    %v733 = vsel %vm325, %v731, 0
    %735 = vmatprep.subr.mxu0 0.0
    %736 = vmatpush1.msra.mxu0 %v87
    %737 = vmatprep.subr.mxu0 0.0
    %738 = vmatpush1.msra.mxu0 %v88
    %739 = vmatprep.subr.mxu0 0.0
    %740 = vmatpush1.msra.mxu0 %v89
    %741 = vmatprep.subr.mxu0 0.0
    %742 = vmatpush1.msra.mxu0 %v90
    %743 = vmatprep.subr.mxu0 0.0
    %744 = vmatpush1.msra.mxu0 %v91
    %745 = vmatprep.subr.mxu0 0.0
    %746 = vmatpush1.msra.mxu0 %v92
    %747 = vmatprep.subr.mxu0 0.0
    %748 = vmatpush1.msra.mxu0 %v93
    %749 = vmatprep.subr.mxu0 0.0
    %750 = vmatpush1.msra.mxu0 %v94
    %751 = vmatprep.subr.mxu0 0.0
    %752 = vmatpush1.msra.mxu0 0.0
    %753 = vmatprep.subr.mxu0 0.0
    %754 = vmatpush1.msra.mxu0 0.0
    %755 = vmatprep.subr.mxu0 0.0
    %756 = vmatpush1.msra.mxu0 0.0
    %757 = vmatprep.subr.mxu0 0.0
    %758 = vmatpush1.msra.mxu0 0.0
    %759 = vmatprep.subr.mxu0 0.0
    %760 = vmatpush1.msra.mxu0 0.0
    %761 = vmatprep.subr.mxu0 0.0
    %762 = vmatpush1.msra.mxu0 0.0
    %763 = vmatprep.subr.mxu0 0.0
    %764 = vmatpush1.msra.mxu0 0.0
    %765 = vmatprep.subr.mxu0 0.0
    %766 = vmatpush1.msra.mxu0 0.0
    %767 = vmatprep.subr.mxu0 0.0
    %768 = vmatpush1.msra.mxu0 0.0
    %769 = vmatprep.subr.mxu0 0.0
    %770 = vmatpush1.msra.mxu0 0.0
    %771 = vmatprep.subr.mxu0 0.0
    %772 = vmatpush1.msra.mxu0 0.0
    %773 = vmatprep.subr.mxu0 0.0
    %774 = vmatpush1.msra.mxu0 0.0
    %775 = vmatprep.subr.mxu0 0.0
    %776 = vmatpush1.msra.mxu0 0.0
    %777 = vmatprep.subr.mxu0 0.0
    %778 = vmatpush1.msra.mxu0 0.0
    %779 = vmatprep.subr.mxu0 0.0
    %780 = vmatpush1.msra.mxu0 0.0
    %781 = vmatprep.subr.mxu0 0.0
    %782 = vmatpush1.msra.mxu0 0.0
    %783 = vmatprep.subr.mxu0 0.0
    %784 = vmatpush1.msra.mxu0 0.0
    %785 = vmatprep.subr.mxu0 0.0
    %786 = vmatpush1.msra.mxu0 0.0
    %787 = vmatprep.subr.mxu0 0.0
    %788 = vmatpush1.msra.mxu0 0.0
    %789 = vmatprep.subr.mxu0 0.0
    %790 = vmatpush1.msra.mxu0 0.0
    %791 = vmatprep.subr.mxu0 0.0
    %792 = vmatpush1.msra.mxu0 0.0
    %793 = vmatprep.subr.mxu0 0.0
    %794 = vmatpush1.msra.mxu0 0.0
    %795 = vmatprep.subr.mxu0 0.0
    %796 = vmatpush1.msra.mxu0 0.0
    %797 = vmatprep.subr.mxu0 0.0
    %798 = vmatpush1.msra.mxu0 0.0
    %799 = vmatprep.mubr.f32.mxu0 0.0
    %800 = vmatmul.mubr.f32.gmra.mrb[0].mxu0 %v733
    %v801 = vpop.f32.mrb[0].mxu0
    %v802 = vadd.f32 %v323, %v801
    %v803 = vpop.f32.mrb[0].mxu0
    %804 = vdwg.mxu0
    %v805 = vxor.u32 %v802, 2147483648
    %v806 = vmul.f32 %v805, 1.442695
    %v807 = vpow.pop %v806
    %v808 = vadd.f32 %v807, 1.0
    %v809 = vrcp.pop %v808
    %v810 = vmul.f32 1.0, %v809
    %v811 = vtanh.pop %v802
    %v812 = vmul.f32 %v810, %v619
    %814 = vrot.lane.b32.xlu0 %v811, 32
    %v815 = vpop.permute.xlu0 %814
    %v817 = vmul.f32 %v810, %v815
    %819 = vrot.lane.b32.xlu0 %v817, 32
    %v820 = vpop.permute.xlu0 %819
    %v822 = vadd.f32 %v812, %v820
    %v823 = vtanh.pop %v822
    %825 = vrot.lane.b32.xlu0 %v823, 32
    %v826 = vpop.permute.xlu0 %825
    %v828 = vmul.f32 %v810, %v826
    %v829 = vsel %vm215, %v725, 0
    %831 = vmatprep.subr.mxu0 0.0
    %832 = vmatpush1.msra.mxu0 %v83
    %833 = vmatprep.subr.mxu0 0.0
    %834 = vmatpush1.msra.mxu0 %v84
    %835 = vmatprep.subr.mxu0 0.0
    %836 = vmatpush1.msra.mxu0 %v85
    %837 = vmatprep.subr.mxu0 0.0
    %838 = vmatpush1.msra.mxu0 %v86
    %839 = vmatprep.subr.mxu0 0.0
    %840 = vmatpush1.msra.mxu0 0.0
    %841 = vmatprep.subr.mxu0 0.0
    %842 = vmatpush1.msra.mxu0 0.0
    %843 = vmatprep.subr.mxu0 0.0
    %844 = vmatpush1.msra.mxu0 0.0
    %845 = vmatprep.subr.mxu0 0.0
    %846 = vmatpush1.msra.mxu0 0.0
    %847 = vmatprep.subr.mxu0 0.0
    %848 = vmatpush1.msra.mxu0 0.0
    %849 = vmatprep.subr.mxu0 0.0
    %850 = vmatpush1.msra.mxu0 0.0
    %851 = vmatprep.subr.mxu0 0.0
    %852 = vmatpush1.msra.mxu0 0.0
    %853 = vmatprep.subr.mxu0 0.0
    %854 = vmatpush1.msra.mxu0 0.0
    %855 = vmatprep.subr.mxu0 0.0
    %856 = vmatpush1.msra.mxu0 0.0
    %857 = vmatprep.subr.mxu0 0.0
    %858 = vmatpush1.msra.mxu0 0.0
    %859 = vmatprep.subr.mxu0 0.0
    %860 = vmatpush1.msra.mxu0 0.0
    %861 = vmatprep.subr.mxu0 0.0
    %862 = vmatpush1.msra.mxu0 0.0
    %863 = vmatprep.subr.mxu0 0.0
    %864 = vmatpush1.msra.mxu0 0.0
    %865 = vmatprep.subr.mxu0 0.0
    %866 = vmatpush1.msra.mxu0 0.0
    %867 = vmatprep.subr.mxu0 0.0
    %868 = vmatpush1.msra.mxu0 0.0
    %869 = vmatprep.subr.mxu0 0.0
    %870 = vmatpush1.msra.mxu0 0.0
    %871 = vmatprep.subr.mxu0 0.0
    %872 = vmatpush1.msra.mxu0 0.0
    %873 = vmatprep.subr.mxu0 0.0
    %874 = vmatpush1.msra.mxu0 0.0
    %875 = vmatprep.subr.mxu0 0.0
    %876 = vmatpush1.msra.mxu0 0.0
    %877 = vmatprep.subr.mxu0 0.0
    %878 = vmatpush1.msra.mxu0 0.0
    %879 = vmatprep.subr.mxu0 0.0
    %880 = vmatpush1.msra.mxu0 0.0
    %881 = vmatprep.subr.mxu0 0.0
    %882 = vmatpush1.msra.mxu0 0.0
    %883 = vmatprep.subr.mxu0 0.0
    %884 = vmatpush1.msra.mxu0 0.0
    %885 = vmatprep.subr.mxu0 0.0
    %886 = vmatpush1.msra.mxu0 0.0
    %887 = vmatprep.subr.mxu0 0.0
    %888 = vmatpush1.msra.mxu0 0.0
    %889 = vmatprep.subr.mxu0 0.0
    %890 = vmatpush1.msra.mxu0 0.0
    %891 = vmatprep.subr.mxu0 0.0
    %892 = vmatpush1.msra.mxu0 0.0
    %893 = vmatprep.subr.mxu0 0.0
    %894 = vmatpush1.msra.mxu0 0.0
    %895 = vmatprep.mubr.f32.mxu0 0.0
    %896 = vmatmul.mubr.f32.gmra.mrb[0].mxu0 %v829
    %v897 = vpop.f32.mrb[0].mxu0
    %v898 = vadd.f32 0.0, %v897
    %v899 = vpop.f32.mrb[0].mxu0
    %900 = vdwg.mxu0
    %v901 = vadd.f32 %v210, %v898
    %v902 = vxor.u32 %v901, 2147483648
    %v903 = vmul.f32 %v902, 1.442695
    %v904 = vpow.pop %v903
    %v905 = vadd.f32 %v904, 1.0
    %v906 = vrcp.pop %v905
    %v907 = vmul.f32 1.0, %v906
    %v908 = vtanh.pop %v901
    %v909 = vmul.f32 %v907, %v716
    %911 = vrot.lane.b32.xlu0 %v908, 32
    %v912 = vpop.permute.xlu0 %911
    %v914 = vmul.f32 %v907, %v912
    %916 = vrot.lane.b32.xlu0 %v914, 32
    %v917 = vpop.permute.xlu0 %916
    %v919 = vadd.f32 %v909, %v917
    %v920 = vtanh.pop %v919
    %922 = vrot.lane.b32.xlu0 %v920, 32
    %v923 = vpop.permute.xlu0 %922
    %v925 = vmul.f32 %v907, %v923
    %927 = vrot.lane.b32.xlu0 %v925, 64
    %v928 = vpop.permute.xlu0 %927
    %931 = vrot.lane.b32.xlu0 %v828, 96
    %v932 = vpop.permute.xlu0 %931
    %v934 = vsel %vm215, %v928, %v932
    %v936 = vsel %vm325, %v934, 0
    %938 = vmatprep.subr.mxu0 0.0
    %939 = vmatpush1.msra.mxu0 %v87
    %940 = vmatprep.subr.mxu0 0.0
    %941 = vmatpush1.msra.mxu0 %v88
    %942 = vmatprep.subr.mxu0 0.0
    %943 = vmatpush1.msra.mxu0 %v89
    %944 = vmatprep.subr.mxu0 0.0
    %945 = vmatpush1.msra.mxu0 %v90
    %946 = vmatprep.subr.mxu0 0.0
    %947 = vmatpush1.msra.mxu0 %v91
    %948 = vmatprep.subr.mxu0 0.0
    %949 = vmatpush1.msra.mxu0 %v92
    %950 = vmatprep.subr.mxu0 0.0
    %951 = vmatpush1.msra.mxu0 %v93
    %952 = vmatprep.subr.mxu0 0.0
    %953 = vmatpush1.msra.mxu0 %v94
    %954 = vmatprep.subr.mxu0 0.0
    %955 = vmatpush1.msra.mxu0 0.0
    %956 = vmatprep.subr.mxu0 0.0
    %957 = vmatpush1.msra.mxu0 0.0
    %958 = vmatprep.subr.mxu0 0.0
    %959 = vmatpush1.msra.mxu0 0.0
    %960 = vmatprep.subr.mxu0 0.0
    %961 = vmatpush1.msra.mxu0 0.0
    %962 = vmatprep.subr.mxu0 0.0
    %963 = vmatpush1.msra.mxu0 0.0
    %964 = vmatprep.subr.mxu0 0.0
    %965 = vmatpush1.msra.mxu0 0.0
    %966 = vmatprep.subr.mxu0 0.0
    %967 = vmatpush1.msra.mxu0 0.0
    %968 = vmatprep.subr.mxu0 0.0
    %969 = vmatpush1.msra.mxu0 0.0
    %970 = vmatprep.subr.mxu0 0.0
    %971 = vmatpush1.msra.mxu0 0.0
    %972 = vmatprep.subr.mxu0 0.0
    %973 = vmatpush1.msra.mxu0 0.0
    %974 = vmatprep.subr.mxu0 0.0
    %975 = vmatpush1.msra.mxu0 0.0
    %976 = vmatprep.subr.mxu0 0.0
    %977 = vmatpush1.msra.mxu0 0.0
    %978 = vmatprep.subr.mxu0 0.0
    %979 = vmatpush1.msra.mxu0 0.0
    %980 = vmatprep.subr.mxu0 0.0
    %981 = vmatpush1.msra.mxu0 0.0
    %982 = vmatprep.subr.mxu0 0.0
    %983 = vmatpush1.msra.mxu0 0.0
    %984 = vmatprep.subr.mxu0 0.0
    %985 = vmatpush1.msra.mxu0 0.0
    %986 = vmatprep.subr.mxu0 0.0
    %987 = vmatpush1.msra.mxu0 0.0
    %988 = vmatprep.subr.mxu0 0.0
    %989 = vmatpush1.msra.mxu0 0.0
    %990 = vmatprep.subr.mxu0 0.0
    %991 = vmatpush1.msra.mxu0 0.0
    %992 = vmatprep.subr.mxu0 0.0
    %993 = vmatpush1.msra.mxu0 0.0
    %994 = vmatprep.subr.mxu0 0.0
    %995 = vmatpush1.msra.mxu0 0.0
    %996 = vmatprep.subr.mxu0 0.0
    %997 = vmatpush1.msra.mxu0 0.0
    %998 = vmatprep.subr.mxu0 0.0
    %999 = vmatpush1.msra.mxu0 0.0
    %1000 = vmatprep.subr.mxu0 0.0
    %1001 = vmatpush1.msra.mxu0 0.0
    %1002 = vmatprep.mubr.f32.mxu0 0.0
    %1003 = vmatmul.mubr.f32.gmra.mrb[0].mxu0 %v936
    %v1004 = vpop.f32.mrb[0].mxu0
    %v1005 = vadd.f32 %v323, %v1004
    %v1006 = vpop.f32.mrb[0].mxu0
    %1007 = vdwg.mxu0
    %v1008 = vxor.u32 %v1005, 2147483648
    %v1009 = vmul.f32 %v1008, 1.442695
    %v1010 = vpow.pop %v1009
    %v1011 = vadd.f32 %v1010, 1.0
    %v1012 = vrcp.pop %v1011
    %v1013 = vmul.f32 1.0, %v1012
    %v1014 = vtanh.pop %v1005
    %v1015 = vmul.f32 %v1013, %v822
    %1017 = vrot.lane.b32.xlu0 %v1014, 32
    %v1018 = vpop.permute.xlu0 %1017
    %v1020 = vmul.f32 %v1013, %v1018
    %1022 = vrot.lane.b32.xlu0 %v1020, 32
    %v1023 = vpop.permute.xlu0 %1022
    %v1025 = vadd.f32 %v1015, %v1023
    %v1026 = vtanh.pop %v1025
    %1028 = vrot.lane.b32.xlu0 %v1026, 32
    %v1029 = vpop.permute.xlu0 %1028
    %v1031 = vmul.f32 %v1013, %v1029
    %v1032 = vsel %vm215, %v928, 0
    %1034 = vmatprep.subr.mxu0 0.0
    %1035 = vmatpush1.msra.mxu0 %v83
    %1036 = vmatprep.subr.mxu0 0.0
    %1037 = vmatpush1.msra.mxu0 %v84
    %1038 = vmatprep.subr.mxu0 0.0
    %1039 = vmatpush1.msra.mxu0 %v85
    %1040 = vmatprep.subr.mxu0 0.0
    %1041 = vmatpush1.msra.mxu0 %v86
    %1042 = vmatprep.subr.mxu0 0.0
    %1043 = vmatpush1.msra.mxu0 0.0
    %1044 = vmatprep.subr.mxu0 0.0
    %1045 = vmatpush1.msra.mxu0 0.0
    %1046 = vmatprep.subr.mxu0 0.0
    %1047 = vmatpush1.msra.mxu0 0.0
    %1048 = vmatprep.subr.mxu0 0.0
    %1049 = vmatpush1.msra.mxu0 0.0
    %1050 = vmatprep.subr.mxu0 0.0
    %1051 = vmatpush1.msra.mxu0 0.0
    %1052 = vmatprep.subr.mxu0 0.0
    %1053 = vmatpush1.msra.mxu0 0.0
    %1054 = vmatprep.subr.mxu0 0.0
    %1055 = vmatpush1.msra.mxu0 0.0
    %1056 = vmatprep.subr.mxu0 0.0
    %1057 = vmatpush1.msra.mxu0 0.0
    %1058 = vmatprep.subr.mxu0 0.0
    %1059 = vmatpush1.msra.mxu0 0.0
    %1060 = vmatprep.subr.mxu0 0.0
    %1061 = vmatpush1.msra.mxu0 0.0
    %1062 = vmatprep.subr.mxu0 0.0
    %1063 = vmatpush1.msra.mxu0 0.0
    %1064 = vmatprep.subr.mxu0 0.0
    %1065 = vmatpush1.msra.mxu0 0.0
    %1066 = vmatprep.subr.mxu0 0.0
    %1067 = vmatpush1.msra.mxu0 0.0
    %1068 = vmatprep.subr.mxu0 0.0
    %1069 = vmatpush1.msra.mxu0 0.0
    %1070 = vmatprep.subr.mxu0 0.0
    %1071 = vmatpush1.msra.mxu0 0.0
    %1072 = vmatprep.subr.mxu0 0.0
    %1073 = vmatpush1.msra.mxu0 0.0
    %1074 = vmatprep.subr.mxu0 0.0
    %1075 = vmatpush1.msra.mxu0 0.0
    %1076 = vmatprep.subr.mxu0 0.0
    %1077 = vmatpush1.msra.mxu0 0.0
    %1078 = vmatprep.subr.mxu0 0.0
    %1079 = vmatpush1.msra.mxu0 0.0
    %1080 = vmatprep.subr.mxu0 0.0
    %1081 = vmatpush1.msra.mxu0 0.0
    %1082 = vmatprep.subr.mxu0 0.0
    %1083 = vmatpush1.msra.mxu0 0.0
    %1084 = vmatprep.subr.mxu0 0.0
    %1085 = vmatpush1.msra.mxu0 0.0
    %1086 = vmatprep.subr.mxu0 0.0
    %1087 = vmatpush1.msra.mxu0 0.0
    %1088 = vmatprep.subr.mxu0 0.0
    %1089 = vmatpush1.msra.mxu0 0.0
    %1090 = vmatprep.subr.mxu0 0.0
    %1091 = vmatpush1.msra.mxu0 0.0
    %1092 = vmatprep.subr.mxu0 0.0
    %1093 = vmatpush1.msra.mxu0 0.0
    %1094 = vmatprep.subr.mxu0 0.0
    %1095 = vmatpush1.msra.mxu0 0.0
    %1096 = vmatprep.subr.mxu0 0.0
    %1097 = vmatpush1.msra.mxu0 0.0
    %1098 = vmatprep.mubr.f32.mxu0 0.0
    %1099 = vmatmul.mubr.f32.gmra.mrb[0].mxu0 %v1032
    %v1100 = vpop.f32.mrb[0].mxu0
    %v1101 = vadd.f32 0.0, %v1100
    %v1102 = vpop.f32.mrb[0].mxu0
    %1103 = vdwg.mxu0
    %v1104 = vadd.f32 %v211, %v1101
    %v1105 = vxor.u32 %v1104, 2147483648
    %v1106 = vmul.f32 %v1105, 1.442695
    %v1107 = vpow.pop %v1106
    %v1108 = vadd.f32 %v1107, 1.0
    %v1109 = vrcp.pop %v1108
    %v1110 = vmul.f32 1.0, %v1109
    %v1111 = vtanh.pop %v1104
    %v1112 = vmul.f32 %v1110, %v919
    %1114 = vrot.lane.b32.xlu0 %v1111, 32
    %v1115 = vpop.permute.xlu0 %1114
    %v1117 = vmul.f32 %v1110, %v1115
    %1119 = vrot.lane.b32.xlu0 %v1117, 32
    %v1120 = vpop.permute.xlu0 %1119
    %v1122 = vadd.f32 %v1112, %v1120
    %v1123 = vtanh.pop %v1122
    %1125 = vrot.lane.b32.xlu0 %v1123, 32
    %v1126 = vpop.permute.xlu0 %1125
    %v1128 = vmul.f32 %v1110, %v1126
    %1130 = vrot.lane.b32.xlu0 %v1128, 64
    %v1131 = vpop.permute.xlu0 %1130
    %1134 = vrot.lane.b32.xlu0 %v1031, 96
    %v1135 = vpop.permute.xlu0 %1134
    %v1137 = vsel %vm215, %v1131, %v1135
    %v1139 = vsel %vm325, %v1137, 0
    %1141 = vmatprep.subr.mxu0 0.0
    %1142 = vmatpush1.msra.mxu0 %v87
    %1143 = vmatprep.subr.mxu0 0.0
    %1144 = vmatpush1.msra.mxu0 %v88
    %1145 = vmatprep.subr.mxu0 0.0
    %1146 = vmatpush1.msra.mxu0 %v89
    %1147 = vmatprep.subr.mxu0 0.0
    %1148 = vmatpush1.msra.mxu0 %v90
    %1149 = vmatprep.subr.mxu0 0.0
    %1150 = vmatpush1.msra.mxu0 %v91
    %1151 = vmatprep.subr.mxu0 0.0
    %1152 = vmatpush1.msra.mxu0 %v92
    %1153 = vmatprep.subr.mxu0 0.0
    %1154 = vmatpush1.msra.mxu0 %v93
    %1155 = vmatprep.subr.mxu0 0.0
    %1156 = vmatpush1.msra.mxu0 %v94
    %1157 = vmatprep.subr.mxu0 0.0
    %1158 = vmatpush1.msra.mxu0 0.0
    %1159 = vmatprep.subr.mxu0 0.0
    %1160 = vmatpush1.msra.mxu0 0.0
    %1161 = vmatprep.subr.mxu0 0.0
    %1162 = vmatpush1.msra.mxu0 0.0
    %1163 = vmatprep.subr.mxu0 0.0
    %1164 = vmatpush1.msra.mxu0 0.0
    %1165 = vmatprep.subr.mxu0 0.0
    %1166 = vmatpush1.msra.mxu0 0.0
    %1167 = vmatprep.subr.mxu0 0.0
    %1168 = vmatpush1.msra.mxu0 0.0
    %1169 = vmatprep.subr.mxu0 0.0
    %1170 = vmatpush1.msra.mxu0 0.0
    %1171 = vmatprep.subr.mxu0 0.0
    %1172 = vmatpush1.msra.mxu0 0.0
    %1173 = vmatprep.subr.mxu0 0.0
    %1174 = vmatpush1.msra.mxu0 0.0
    %1175 = vmatprep.subr.mxu0 0.0
    %1176 = vmatpush1.msra.mxu0 0.0
    %1177 = vmatprep.subr.mxu0 0.0
    %1178 = vmatpush1.msra.mxu0 0.0
    %1179 = vmatprep.subr.mxu0 0.0
    %1180 = vmatpush1.msra.mxu0 0.0
    %1181 = vmatprep.subr.mxu0 0.0
    %1182 = vmatpush1.msra.mxu0 0.0
    %1183 = vmatprep.subr.mxu0 0.0
    %1184 = vmatpush1.msra.mxu0 0.0
    %1185 = vmatprep.subr.mxu0 0.0
    %1186 = vmatpush1.msra.mxu0 0.0
    %1187 = vmatprep.subr.mxu0 0.0
    %1188 = vmatpush1.msra.mxu0 0.0
    %1189 = vmatprep.subr.mxu0 0.0
    %1190 = vmatpush1.msra.mxu0 0.0
    %1191 = vmatprep.subr.mxu0 0.0
    %1192 = vmatpush1.msra.mxu0 0.0
    %1193 = vmatprep.subr.mxu0 0.0
    %1194 = vmatpush1.msra.mxu0 0.0
    %1195 = vmatprep.subr.mxu0 0.0
    %1196 = vmatpush1.msra.mxu0 0.0
    %1197 = vmatprep.subr.mxu0 0.0
    %1198 = vmatpush1.msra.mxu0 0.0
    %1199 = vmatprep.subr.mxu0 0.0
    %1200 = vmatpush1.msra.mxu0 0.0
    %1201 = vmatprep.subr.mxu0 0.0
    %1202 = vmatpush1.msra.mxu0 0.0
    %1203 = vmatprep.subr.mxu0 0.0
    %1204 = vmatpush1.msra.mxu0 0.0
    %1205 = vmatprep.mubr.f32.mxu0 0.0
    %1206 = vmatmul.mubr.f32.gmra.mrb[0].mxu0 %v1139
    %v1207 = vpop.f32.mrb[0].mxu0
    %v1208 = vadd.f32 %v323, %v1207
    %v1209 = vpop.f32.mrb[0].mxu0
    %1210 = vdwg.mxu0
    %v1211 = vxor.u32 %v1208, 2147483648
    %v1212 = vmul.f32 %v1211, 1.442695
    %v1213 = vpow.pop %v1212
    %v1214 = vadd.f32 %v1213, 1.0
    %v1215 = vrcp.pop %v1214
    %v1216 = vmul.f32 1.0, %v1215
    %v1217 = vtanh.pop %v1208
    %v1218 = vmul.f32 %v1216, %v1025
    %1220 = vrot.lane.b32.xlu0 %v1217, 32
    %v1221 = vpop.permute.xlu0 %1220
    %v1223 = vmul.f32 %v1216, %v1221
    %1225 = vrot.lane.b32.xlu0 %v1223, 32
    %v1226 = vpop.permute.xlu0 %1225
    %v1228 = vadd.f32 %v1218, %v1226
    %v1229 = vtanh.pop %v1228
    %1231 = vrot.lane.b32.xlu0 %v1229, 32
    %v1232 = vpop.permute.xlu0 %1231
    %v1234 = vmul.f32 %v1216, %v1232
    %v1235 = vsel %vm215, %v1131, 0
    %1237 = vmatprep.subr.mxu0 0.0
    %1238 = vmatpush1.msra.mxu0 %v83
    %1239 = vmatprep.subr.mxu0 0.0
    %1240 = vmatpush1.msra.mxu0 %v84
    %1241 = vmatprep.subr.mxu0 0.0
    %1242 = vmatpush1.msra.mxu0 %v85
    %1243 = vmatprep.subr.mxu0 0.0
    %1244 = vmatpush1.msra.mxu0 %v86
    %1245 = vmatprep.subr.mxu0 0.0
    %1246 = vmatpush1.msra.mxu0 0.0
    %1247 = vmatprep.subr.mxu0 0.0
    %1248 = vmatpush1.msra.mxu0 0.0
    %1249 = vmatprep.subr.mxu0 0.0
    %1250 = vmatpush1.msra.mxu0 0.0
    %1251 = vmatprep.subr.mxu0 0.0
    %1252 = vmatpush1.msra.mxu0 0.0
    %1253 = vmatprep.subr.mxu0 0.0
    %1254 = vmatpush1.msra.mxu0 0.0
    %1255 = vmatprep.subr.mxu0 0.0
    %1256 = vmatpush1.msra.mxu0 0.0
    %1257 = vmatprep.subr.mxu0 0.0
    %1258 = vmatpush1.msra.mxu0 0.0
    %1259 = vmatprep.subr.mxu0 0.0
    %1260 = vmatpush1.msra.mxu0 0.0
    %1261 = vmatprep.subr.mxu0 0.0
    %1262 = vmatpush1.msra.mxu0 0.0
    %1263 = vmatprep.subr.mxu0 0.0
    %1264 = vmatpush1.msra.mxu0 0.0
    %1265 = vmatprep.subr.mxu0 0.0
    %1266 = vmatpush1.msra.mxu0 0.0
    %1267 = vmatprep.subr.mxu0 0.0
    %1268 = vmatpush1.msra.mxu0 0.0
    %1269 = vmatprep.subr.mxu0 0.0
    %1270 = vmatpush1.msra.mxu0 0.0
    %1271 = vmatprep.subr.mxu0 0.0
    %1272 = vmatpush1.msra.mxu0 0.0
    %1273 = vmatprep.subr.mxu0 0.0
    %1274 = vmatpush1.msra.mxu0 0.0
    %1275 = vmatprep.subr.mxu0 0.0
    %1276 = vmatpush1.msra.mxu0 0.0
    %1277 = vmatprep.subr.mxu0 0.0
    %1278 = vmatpush1.msra.mxu0 0.0
    %1279 = vmatprep.subr.mxu0 0.0
    %1280 = vmatpush1.msra.mxu0 0.0
    %1281 = vmatprep.subr.mxu0 0.0
    %1282 = vmatpush1.msra.mxu0 0.0
    %1283 = vmatprep.subr.mxu0 0.0
    %1284 = vmatpush1.msra.mxu0 0.0
    %1285 = vmatprep.subr.mxu0 0.0
    %1286 = vmatpush1.msra.mxu0 0.0
    %1287 = vmatprep.subr.mxu0 0.0
    %1288 = vmatpush1.msra.mxu0 0.0
    %1289 = vmatprep.subr.mxu0 0.0
    %1290 = vmatpush1.msra.mxu0 0.0
    %1291 = vmatprep.subr.mxu0 0.0
    %1292 = vmatpush1.msra.mxu0 0.0
    %1293 = vmatprep.subr.mxu0 0.0
    %1294 = vmatpush1.msra.mxu0 0.0
    %1295 = vmatprep.subr.mxu0 0.0
    %1296 = vmatpush1.msra.mxu0 0.0
    %1297 = vmatprep.subr.mxu0 0.0
    %1298 = vmatpush1.msra.mxu0 0.0
    %1299 = vmatprep.subr.mxu0 0.0
    %1300 = vmatpush1.msra.mxu0 0.0
    %1301 = vmatprep.mubr.f32.mxu0 0.0
    %1302 = vmatmul.mubr.f32.gmra.mrb[0].mxu0 %v1235
    %v1303 = vpop.f32.mrb[0].mxu0
    %v1304 = vadd.f32 0.0, %v1303
    %v1305 = vpop.f32.mrb[0].mxu0
    %1306 = vdwg.mxu0
    %v1307 = vadd.f32 %v212, %v1304
    %v1308 = vxor.u32 %v1307, 2147483648
    %v1309 = vmul.f32 %v1308, 1.442695
    %v1310 = vpow.pop %v1309
    %v1311 = vadd.f32 %v1310, 1.0
    %v1312 = vrcp.pop %v1311
    %v1313 = vmul.f32 1.0, %v1312
    %v1314 = vtanh.pop %v1307
    %v1315 = vmul.f32 %v1313, %v1122
    %1317 = vrot.lane.b32.xlu0 %v1314, 32
    %v1318 = vpop.permute.xlu0 %1317
    %v1320 = vmul.f32 %v1313, %v1318
    %1322 = vrot.lane.b32.xlu0 %v1320, 32
    %v1323 = vpop.permute.xlu0 %1322
    %v1325 = vadd.f32 %v1315, %v1323
    %v1326 = vtanh.pop %v1325
    %1328 = vrot.lane.b32.xlu0 %v1326, 32
    %v1329 = vpop.permute.xlu0 %1328
    %v1331 = vmul.f32 %v1313, %v1329
    %1333 = vrot.lane.b32.xlu0 %v1331, 64
    %v1334 = vpop.permute.xlu0 %1333
    %1337 = vrot.lane.b32.xlu0 %v1234, 96
    %v1338 = vpop.permute.xlu0 %1337
    %v1340 = vsel %vm215, %v1334, %v1338
    %v1342 = vsel %vm325, %v1340, 0
    %1344 = vmatprep.subr.mxu0 0.0
    %1345 = vmatpush1.msra.mxu0 %v87
    %1346 = vmatprep.subr.mxu0 0.0
    %1347 = vmatpush1.msra.mxu0 %v88
    %1348 = vmatprep.subr.mxu0 0.0
    %1349 = vmatpush1.msra.mxu0 %v89
    %1350 = vmatprep.subr.mxu0 0.0
    %1351 = vmatpush1.msra.mxu0 %v90
    %1352 = vmatprep.subr.mxu0 0.0
    %1353 = vmatpush1.msra.mxu0 %v91
    %1354 = vmatprep.subr.mxu0 0.0
    %1355 = vmatpush1.msra.mxu0 %v92
    %1356 = vmatprep.subr.mxu0 0.0
    %1357 = vmatpush1.msra.mxu0 %v93
    %1358 = vmatprep.subr.mxu0 0.0
    %1359 = vmatpush1.msra.mxu0 %v94
    %1360 = vmatprep.subr.mxu0 0.0
    %1361 = vmatpush1.msra.mxu0 0.0
    %1362 = vmatprep.subr.mxu0 0.0
    %1363 = vmatpush1.msra.mxu0 0.0
    %1364 = vmatprep.subr.mxu0 0.0
    %1365 = vmatpush1.msra.mxu0 0.0
    %1366 = vmatprep.subr.mxu0 0.0
    %1367 = vmatpush1.msra.mxu0 0.0
    %1368 = vmatprep.subr.mxu0 0.0
    %1369 = vmatpush1.msra.mxu0 0.0
    %1370 = vmatprep.subr.mxu0 0.0
    %1371 = vmatpush1.msra.mxu0 0.0
    %1372 = vmatprep.subr.mxu0 0.0
    %1373 = vmatpush1.msra.mxu0 0.0
    %1374 = vmatprep.subr.mxu0 0.0
    %1375 = vmatpush1.msra.mxu0 0.0
    %1376 = vmatprep.subr.mxu0 0.0
    %1377 = vmatpush1.msra.mxu0 0.0
    %1378 = vmatprep.subr.mxu0 0.0
    %1379 = vmatpush1.msra.mxu0 0.0
    %1380 = vmatprep.subr.mxu0 0.0
    %1381 = vmatpush1.msra.mxu0 0.0
    %1382 = vmatprep.subr.mxu0 0.0
    %1383 = vmatpush1.msra.mxu0 0.0
    %1384 = vmatprep.subr.mxu0 0.0
    %1385 = vmatpush1.msra.mxu0 0.0
    %1386 = vmatprep.subr.mxu0 0.0
    %1387 = vmatpush1.msra.mxu0 0.0
    %1388 = vmatprep.subr.mxu0 0.0
    %1389 = vmatpush1.msra.mxu0 0.0
    %1390 = vmatprep.subr.mxu0 0.0
    %1391 = vmatpush1.msra.mxu0 0.0
    %1392 = vmatprep.subr.mxu0 0.0
    %1393 = vmatpush1.msra.mxu0 0.0
    %1394 = vmatprep.subr.mxu0 0.0
    %1395 = vmatpush1.msra.mxu0 0.0
    %1396 = vmatprep.subr.mxu0 0.0
    %1397 = vmatpush1.msra.mxu0 0.0
    %1398 = vmatprep.subr.mxu0 0.0
    %1399 = vmatpush1.msra.mxu0 0.0
    %1400 = vmatprep.subr.mxu0 0.0
    %1401 = vmatpush1.msra.mxu0 0.0
    %1402 = vmatprep.subr.mxu0 0.0
    %1403 = vmatpush1.msra.mxu0 0.0
    %1404 = vmatprep.subr.mxu0 0.0
    %1405 = vmatpush1.msra.mxu0 0.0
    %1406 = vmatprep.subr.mxu0 0.0
    %1407 = vmatpush1.msra.mxu0 0.0
    %1408 = vmatprep.mubr.f32.mxu0 0.0
    %1409 = vmatmul.mubr.f32.gmra.mrb[0].mxu0 %v1342
    %v1410 = vpop.f32.mrb[0].mxu0
    %v1411 = vadd.f32 %v323, %v1410
    %v1412 = vpop.f32.mrb[0].mxu0
    %1413 = vdwg.mxu0
    %v1414 = vxor.u32 %v1411, 2147483648
    %v1415 = vmul.f32 %v1414, 1.442695
    %v1416 = vpow.pop %v1415
    %v1417 = vadd.f32 %v1416, 1.0
    %v1418 = vrcp.pop %v1417
    %v1419 = vmul.f32 1.0, %v1418
    %v1420 = vtanh.pop %v1411
    %v1421 = vmul.f32 %v1419, %v1228
    %1423 = vrot.lane.b32.xlu0 %v1420, 32
    %v1424 = vpop.permute.xlu0 %1423
    %v1426 = vmul.f32 %v1419, %v1424
    %1428 = vrot.lane.b32.xlu0 %v1426, 32
    %v1429 = vpop.permute.xlu0 %1428
    %v1431 = vadd.f32 %v1421, %v1429
    %v1432 = vtanh.pop %v1431
    %1434 = vrot.lane.b32.xlu0 %v1432, 32
    %v1435 = vpop.permute.xlu0 %1434
    %v1437 = vmul.f32 %v1419, %v1435
    %v1438 = vsel %vm215, %v1334, 0
    %1440 = vmatprep.subr.mxu0 0.0
    %1441 = vmatpush1.msra.mxu0 %v83
    %1442 = vmatprep.subr.mxu0 0.0
    %1443 = vmatpush1.msra.mxu0 %v84
    %1444 = vmatprep.subr.mxu0 0.0
    %1445 = vmatpush1.msra.mxu0 %v85
    %1446 = vmatprep.subr.mxu0 0.0
    %1447 = vmatpush1.msra.mxu0 %v86
    %1448 = vmatprep.subr.mxu0 0.0
    %1449 = vmatpush1.msra.mxu0 0.0
    %1450 = vmatprep.subr.mxu0 0.0
    %1451 = vmatpush1.msra.mxu0 0.0
    %1452 = vmatprep.subr.mxu0 0.0
    %1453 = vmatpush1.msra.mxu0 0.0
    %1454 = vmatprep.subr.mxu0 0.0
    %1455 = vmatpush1.msra.mxu0 0.0
    %1456 = vmatprep.subr.mxu0 0.0
    %1457 = vmatpush1.msra.mxu0 0.0
    %1458 = vmatprep.subr.mxu0 0.0
    %1459 = vmatpush1.msra.mxu0 0.0
    %1460 = vmatprep.subr.mxu0 0.0
    %1461 = vmatpush1.msra.mxu0 0.0
    %1462 = vmatprep.subr.mxu0 0.0
    %1463 = vmatpush1.msra.mxu0 0.0
    %1464 = vmatprep.subr.mxu0 0.0
    %1465 = vmatpush1.msra.mxu0 0.0
    %1466 = vmatprep.subr.mxu0 0.0
    %1467 = vmatpush1.msra.mxu0 0.0
    %1468 = vmatprep.subr.mxu0 0.0
    %1469 = vmatpush1.msra.mxu0 0.0
    %1470 = vmatprep.subr.mxu0 0.0
    %1471 = vmatpush1.msra.mxu0 0.0
    %1472 = vmatprep.subr.mxu0 0.0
    %1473 = vmatpush1.msra.mxu0 0.0
    %1474 = vmatprep.subr.mxu0 0.0
    %1475 = vmatpush1.msra.mxu0 0.0
    %1476 = vmatprep.subr.mxu0 0.0
    %1477 = vmatpush1.msra.mxu0 0.0
    %1478 = vmatprep.subr.mxu0 0.0
    %1479 = vmatpush1.msra.mxu0 0.0
    %1480 = vmatprep.subr.mxu0 0.0
    %1481 = vmatpush1.msra.mxu0 0.0
    %1482 = vmatprep.subr.mxu0 0.0
    %1483 = vmatpush1.msra.mxu0 0.0
    %1484 = vmatprep.subr.mxu0 0.0
    %1485 = vmatpush1.msra.mxu0 0.0
    %1486 = vmatprep.subr.mxu0 0.0
    %1487 = vmatpush1.msra.mxu0 0.0
    %1488 = vmatprep.subr.mxu0 0.0
    %1489 = vmatpush1.msra.mxu0 0.0
    %1490 = vmatprep.subr.mxu0 0.0
    %1491 = vmatpush1.msra.mxu0 0.0
    %1492 = vmatprep.subr.mxu0 0.0
    %1493 = vmatpush1.msra.mxu0 0.0
    %1494 = vmatprep.subr.mxu0 0.0
    %1495 = vmatpush1.msra.mxu0 0.0
    %1496 = vmatprep.subr.mxu0 0.0
    %1497 = vmatpush1.msra.mxu0 0.0
    %1498 = vmatprep.subr.mxu0 0.0
    %1499 = vmatpush1.msra.mxu0 0.0
    %1500 = vmatprep.subr.mxu0 0.0
    %1501 = vmatpush1.msra.mxu0 0.0
    %1502 = vmatprep.subr.mxu0 0.0
    %1503 = vmatpush1.msra.mxu0 0.0
    %1504 = vmatprep.mubr.f32.mxu0 0.0
    %1505 = vmatmul.mubr.f32.gmra.mrb[0].mxu0 %v1438
    %v1506 = vpop.f32.mrb[0].mxu0
    %v1507 = vadd.f32 0.0, %v1506
    %v1508 = vpop.f32.mrb[0].mxu0
    %1509 = vdwg.mxu0
    %v1510 = vadd.f32 %v213, %v1507
    %v1511 = vxor.u32 %v1510, 2147483648
    %v1512 = vmul.f32 %v1511, 1.442695
    %v1513 = vpow.pop %v1512
    %v1514 = vadd.f32 %v1513, 1.0
    %v1515 = vrcp.pop %v1514
    %v1516 = vmul.f32 1.0, %v1515
    %v1517 = vtanh.pop %v1510
    %v1518 = vmul.f32 %v1516, %v1325
    %1520 = vrot.lane.b32.xlu0 %v1517, 32
    %v1521 = vpop.permute.xlu0 %1520
    %v1523 = vmul.f32 %v1516, %v1521
    %1525 = vrot.lane.b32.xlu0 %v1523, 32
    %v1526 = vpop.permute.xlu0 %1525
    %v1528 = vadd.f32 %v1518, %v1526
    %v1529 = vtanh.pop %v1528
    %1531 = vrot.lane.b32.xlu0 %v1529, 32
    %v1532 = vpop.permute.xlu0 %1531
    %v1534 = vmul.f32 %v1516, %v1532
    %1536 = vrot.lane.b32.xlu0 %v1534, 64
    %v1537 = vpop.permute.xlu0 %1536
    %1540 = vrot.lane.b32.xlu0 %v1437, 96
    %v1541 = vpop.permute.xlu0 %1540
    %v1543 = vsel %vm215, %v1537, %v1541
    %v1545 = vsel %vm325, %v1543, 0
    %1547 = vmatprep.subr.mxu0 0.0
    %1548 = vmatpush1.msra.mxu0 %v87
    %1549 = vmatprep.subr.mxu0 0.0
    %1550 = vmatpush1.msra.mxu0 %v88
    %1551 = vmatprep.subr.mxu0 0.0
    %1552 = vmatpush1.msra.mxu0 %v89
    %1553 = vmatprep.subr.mxu0 0.0
    %1554 = vmatpush1.msra.mxu0 %v90
    %1555 = vmatprep.subr.mxu0 0.0
    %1556 = vmatpush1.msra.mxu0 %v91
    %1557 = vmatprep.subr.mxu0 0.0
    %1558 = vmatpush1.msra.mxu0 %v92
    %1559 = vmatprep.subr.mxu0 0.0
    %1560 = vmatpush1.msra.mxu0 %v93
    %1561 = vmatprep.subr.mxu0 0.0
    %1562 = vmatpush1.msra.mxu0 %v94
    %1563 = vmatprep.subr.mxu0 0.0
    %1564 = vmatpush1.msra.mxu0 0.0
    %1565 = vmatprep.subr.mxu0 0.0
    %1566 = vmatpush1.msra.mxu0 0.0
    %1567 = vmatprep.subr.mxu0 0.0
    %1568 = vmatpush1.msra.mxu0 0.0
    %1569 = vmatprep.subr.mxu0 0.0
    %1570 = vmatpush1.msra.mxu0 0.0
    %1571 = vmatprep.subr.mxu0 0.0
    %1572 = vmatpush1.msra.mxu0 0.0
    %1573 = vmatprep.subr.mxu0 0.0
    %1574 = vmatpush1.msra.mxu0 0.0
    %1575 = vmatprep.subr.mxu0 0.0
    %1576 = vmatpush1.msra.mxu0 0.0
    %1577 = vmatprep.subr.mxu0 0.0
    %1578 = vmatpush1.msra.mxu0 0.0
    %1579 = vmatprep.subr.mxu0 0.0
    %1580 = vmatpush1.msra.mxu0 0.0
    %1581 = vmatprep.subr.mxu0 0.0
    %1582 = vmatpush1.msra.mxu0 0.0
    %1583 = vmatprep.subr.mxu0 0.0
    %1584 = vmatpush1.msra.mxu0 0.0
    %1585 = vmatprep.subr.mxu0 0.0
    %1586 = vmatpush1.msra.mxu0 0.0
    %1587 = vmatprep.subr.mxu0 0.0
    %1588 = vmatpush1.msra.mxu0 0.0
    %1589 = vmatprep.subr.mxu0 0.0
    %1590 = vmatpush1.msra.mxu0 0.0
    %1591 = vmatprep.subr.mxu0 0.0
    %1592 = vmatpush1.msra.mxu0 0.0
    %1593 = vmatprep.subr.mxu0 0.0
    %1594 = vmatpush1.msra.mxu0 0.0
    %1595 = vmatprep.subr.mxu0 0.0
    %1596 = vmatpush1.msra.mxu0 0.0
    %1597 = vmatprep.subr.mxu0 0.0
    %1598 = vmatpush1.msra.mxu0 0.0
    %1599 = vmatprep.subr.mxu0 0.0
    %1600 = vmatpush1.msra.mxu0 0.0
    %1601 = vmatprep.subr.mxu0 0.0
    %1602 = vmatpush1.msra.mxu0 0.0
    %1603 = vmatprep.subr.mxu0 0.0
    %1604 = vmatpush1.msra.mxu0 0.0
    %1605 = vmatprep.subr.mxu0 0.0
    %1606 = vmatpush1.msra.mxu0 0.0
    %1607 = vmatprep.subr.mxu0 0.0
    %1608 = vmatpush1.msra.mxu0 0.0
    %1609 = vmatprep.subr.mxu0 0.0
    %1610 = vmatpush1.msra.mxu0 0.0
    %1611 = vmatprep.mubr.f32.mxu0 0.0
    %1612 = vmatmul.mubr.f32.gmra.mrb[0].mxu0 %v1545
    %v1613 = vpop.f32.mrb[0].mxu0
    %v1614 = vadd.f32 %v323, %v1613
    %v1615 = vpop.f32.mrb[0].mxu0
    %1616 = vdwg.mxu0
    %v1617 = vxor.u32 %v1614, 2147483648
    %v1618 = vmul.f32 %v1617, 1.442695
    %v1619 = vpow.pop %v1618
    %v1620 = vadd.f32 %v1619, 1.0
    %v1621 = vrcp.pop %v1620
    %v1622 = vmul.f32 1.0, %v1621
    %v1623 = vtanh.pop %v1614
    %v1624 = vmul.f32 %v1622, %v1431
    %1626 = vrot.lane.b32.xlu0 %v1623, 32
    %v1627 = vpop.permute.xlu0 %1626
    %v1629 = vmul.f32 %v1622, %v1627
    %1631 = vrot.lane.b32.xlu0 %v1629, 32
    %v1632 = vpop.permute.xlu0 %1631
    %v1634 = vadd.f32 %v1624, %v1632
    %v1635 = vtanh.pop %v1634
    %1637 = vrot.lane.b32.xlu0 %v1635, 32
    %v1638 = vpop.permute.xlu0 %1637
    %v1640 = vmul.f32 %v1622, %v1638
    %v1641 = vsel %vm215, %v1537, 0
    %1643 = vmatprep.subr.mxu0 0.0
    %1644 = vmatpush1.msra.mxu0 %v83
    %1645 = vmatprep.subr.mxu0 0.0
    %1646 = vmatpush1.msra.mxu0 %v84
    %1647 = vmatprep.subr.mxu0 0.0
    %1648 = vmatpush1.msra.mxu0 %v85
    %1649 = vmatprep.subr.mxu0 0.0
    %1650 = vmatpush1.msra.mxu0 %v86
    %1651 = vmatprep.subr.mxu0 0.0
    %1652 = vmatpush1.msra.mxu0 0.0
    %1653 = vmatprep.subr.mxu0 0.0
    %1654 = vmatpush1.msra.mxu0 0.0
    %1655 = vmatprep.subr.mxu0 0.0
    %1656 = vmatpush1.msra.mxu0 0.0
    %1657 = vmatprep.subr.mxu0 0.0
    %1658 = vmatpush1.msra.mxu0 0.0
    %1659 = vmatprep.subr.mxu0 0.0
    %1660 = vmatpush1.msra.mxu0 0.0
    %1661 = vmatprep.subr.mxu0 0.0
    %1662 = vmatpush1.msra.mxu0 0.0
    %1663 = vmatprep.subr.mxu0 0.0
    %1664 = vmatpush1.msra.mxu0 0.0
    %1665 = vmatprep.subr.mxu0 0.0
    %1666 = vmatpush1.msra.mxu0 0.0
    %1667 = vmatprep.subr.mxu0 0.0
    %1668 = vmatpush1.msra.mxu0 0.0
    %1669 = vmatprep.subr.mxu0 0.0
    %1670 = vmatpush1.msra.mxu0 0.0
    %1671 = vmatprep.subr.mxu0 0.0
    %1672 = vmatpush1.msra.mxu0 0.0
    %1673 = vmatprep.subr.mxu0 0.0
    %1674 = vmatpush1.msra.mxu0 0.0
    %1675 = vmatprep.subr.mxu0 0.0
    %1676 = vmatpush1.msra.mxu0 0.0
    %1677 = vmatprep.subr.mxu0 0.0
    %1678 = vmatpush1.msra.mxu0 0.0
    %1679 = vmatprep.subr.mxu0 0.0
    %1680 = vmatpush1.msra.mxu0 0.0
    %1681 = vmatprep.subr.mxu0 0.0
    %1682 = vmatpush1.msra.mxu0 0.0
    %1683 = vmatprep.subr.mxu0 0.0
    %1684 = vmatpush1.msra.mxu0 0.0
    %1685 = vmatprep.subr.mxu0 0.0
    %1686 = vmatpush1.msra.mxu0 0.0
    %1687 = vmatprep.subr.mxu0 0.0
    %1688 = vmatpush1.msra.mxu0 0.0
    %1689 = vmatprep.subr.mxu0 0.0
    %1690 = vmatpush1.msra.mxu0 0.0
    %1691 = vmatprep.subr.mxu0 0.0
    %1692 = vmatpush1.msra.mxu0 0.0
    %1693 = vmatprep.subr.mxu0 0.0
    %1694 = vmatpush1.msra.mxu0 0.0
    %1695 = vmatprep.subr.mxu0 0.0
    %1696 = vmatpush1.msra.mxu0 0.0
    %1697 = vmatprep.subr.mxu0 0.0
    %1698 = vmatpush1.msra.mxu0 0.0
    %1699 = vmatprep.subr.mxu0 0.0
    %1700 = vmatpush1.msra.mxu0 0.0
    %1701 = vmatprep.subr.mxu0 0.0
    %1702 = vmatpush1.msra.mxu0 0.0
    %1703 = vmatprep.subr.mxu0 0.0
    %1704 = vmatpush1.msra.mxu0 0.0
    %1705 = vmatprep.subr.mxu0 0.0
    %1706 = vmatpush1.msra.mxu0 0.0
    %1707 = vmatprep.mubr.f32.mxu0 0.0
    %1708 = vmatmul.mubr.f32.gmra.mrb[0].mxu0 %v1641
    %v1709 = vpop.f32.mrb[0].mxu0
    %v1710 = vadd.f32 0.0, %v1709
    %v1711 = vpop.f32.mrb[0].mxu0
    %1712 = vdwg.mxu0
    %v1713 = vadd.f32 %v214, %v1710
    %v1714 = vxor.u32 %v1713, 2147483648
    %v1715 = vmul.f32 %v1714, 1.442695
    %v1716 = vpow.pop %v1715
    %v1717 = vadd.f32 %v1716, 1.0
    %v1718 = vrcp.pop %v1717
    %v1719 = vmul.f32 1.0, %v1718
    %v1720 = vtanh.pop %v1713
    %v1721 = vmul.f32 %v1719, %v1528
    %1723 = vrot.lane.b32.xlu0 %v1720, 32
    %v1724 = vpop.permute.xlu0 %1723
    %v1726 = vmul.f32 %v1719, %v1724
    %1728 = vrot.lane.b32.xlu0 %v1726, 32
    %v1729 = vpop.permute.xlu0 %1728
    %v1731 = vadd.f32 %v1721, %v1729
    %v1732 = vtanh.pop %v1731
    %1734 = vrot.lane.b32.xlu0 %v1732, 32
    %v1735 = vpop.permute.xlu0 %1734
    %v1737 = vmul.f32 %v1719, %v1735
    %1739 = vrot.lane.b32.xlu0 %v1737, 64
    %v1740 = vpop.permute.xlu0 %1739
    %1743 = vrot.lane.b32.xlu0 %v1640, 96
    %v1744 = vpop.permute.xlu0 %1743
    %v1746 = vsel %vm215, %v1740, %v1744
    %v1748 = vsel %vm325, %v1746, 0
    %1750 = vmatprep.subr.mxu0 0.0
    %1751 = vmatpush1.msra.mxu0 %v87
    %1752 = vmatprep.subr.mxu0 0.0
    %1753 = vmatpush1.msra.mxu0 %v88
    %1754 = vmatprep.subr.mxu0 0.0
    %1755 = vmatpush1.msra.mxu0 %v89
    %1756 = vmatprep.subr.mxu0 0.0
    %1757 = vmatpush1.msra.mxu0 %v90
    %1758 = vmatprep.subr.mxu0 0.0
    %1759 = vmatpush1.msra.mxu0 %v91
    %1760 = vmatprep.subr.mxu0 0.0
    %1761 = vmatpush1.msra.mxu0 %v92
    %1762 = vmatprep.subr.mxu0 0.0
    %1763 = vmatpush1.msra.mxu0 %v93
    %1764 = vmatprep.subr.mxu0 0.0
    %1765 = vmatpush1.msra.mxu0 %v94
    %1766 = vmatprep.subr.mxu0 0.0
    %1767 = vmatpush1.msra.mxu0 0.0
    %1768 = vmatprep.subr.mxu0 0.0
    %1769 = vmatpush1.msra.mxu0 0.0
    %1770 = vmatprep.subr.mxu0 0.0
    %1771 = vmatpush1.msra.mxu0 0.0
    %1772 = vmatprep.subr.mxu0 0.0
    %1773 = vmatpush1.msra.mxu0 0.0
    %1774 = vmatprep.subr.mxu0 0.0
    %1775 = vmatpush1.msra.mxu0 0.0
    %1776 = vmatprep.subr.mxu0 0.0
    %1777 = vmatpush1.msra.mxu0 0.0
    %1778 = vmatprep.subr.mxu0 0.0
    %1779 = vmatpush1.msra.mxu0 0.0
    %1780 = vmatprep.subr.mxu0 0.0
    %1781 = vmatpush1.msra.mxu0 0.0
    %1782 = vmatprep.subr.mxu0 0.0
    %1783 = vmatpush1.msra.mxu0 0.0
    %1784 = vmatprep.subr.mxu0 0.0
    %1785 = vmatpush1.msra.mxu0 0.0
    %1786 = vmatprep.subr.mxu0 0.0
    %1787 = vmatpush1.msra.mxu0 0.0
    %1788 = vmatprep.subr.mxu0 0.0
    %1789 = vmatpush1.msra.mxu0 0.0
    %1790 = vmatprep.subr.mxu0 0.0
    %1791 = vmatpush1.msra.mxu0 0.0
    %1792 = vmatprep.subr.mxu0 0.0
    %1793 = vmatpush1.msra.mxu0 0.0
    %1794 = vmatprep.subr.mxu0 0.0
    %1795 = vmatpush1.msra.mxu0 0.0
    %1796 = vmatprep.subr.mxu0 0.0
    %1797 = vmatpush1.msra.mxu0 0.0
    %1798 = vmatprep.subr.mxu0 0.0
    %1799 = vmatpush1.msra.mxu0 0.0
    %1800 = vmatprep.subr.mxu0 0.0
    %1801 = vmatpush1.msra.mxu0 0.0
    %1802 = vmatprep.subr.mxu0 0.0
    %1803 = vmatpush1.msra.mxu0 0.0
    %1804 = vmatprep.subr.mxu0 0.0
    %1805 = vmatpush1.msra.mxu0 0.0
    %1806 = vmatprep.subr.mxu0 0.0
    %1807 = vmatpush1.msra.mxu0 0.0
    %1808 = vmatprep.subr.mxu0 0.0
    %1809 = vmatpush1.msra.mxu0 0.0
    %1810 = vmatprep.subr.mxu0 0.0
    %1811 = vmatpush1.msra.mxu0 0.0
    %1812 = vmatprep.subr.mxu0 0.0
    %1813 = vmatpush1.msra.mxu0 0.0
    %1814 = vmatprep.mubr.f32.mxu0 0.0
    %1815 = vmatmul.mubr.f32.gmra.mrb[0].mxu0 %v1748
    %v1816 = vpop.f32.mrb[0].mxu0
    %v1817 = vadd.f32 %v323, %v1816
    %v1818 = vpop.f32.mrb[0].mxu0
    %1819 = vdwg.mxu0
    %v1820 = vxor.u32 %v1817, 2147483648
    %v1821 = vmul.f32 %v1820, 1.442695
    %v1822 = vpow.pop %v1821
    %v1823 = vadd.f32 %v1822, 1.0
    %v1824 = vrcp.pop %v1823
    %v1825 = vmul.f32 1.0, %v1824
    %v1826 = vtanh.pop %v1817
    %v1827 = vmul.f32 %v1825, %v1634
    %1829 = vrot.lane.b32.xlu0 %v1826, 32
    %v1830 = vpop.permute.xlu0 %1829
    %v1832 = vmul.f32 %v1825, %v1830
    %1834 = vrot.lane.b32.xlu0 %v1832, 32
    %v1835 = vpop.permute.xlu0 %1834
    %v1837 = vadd.f32 %v1827, %v1835
    %v1838 = vtanh.pop %v1837
    %1840 = vrot.lane.b32.xlu0 %v1838, 32
    %v1841 = vpop.permute.xlu0 %1840
    %v1843 = vmul.f32 %v1825, %v1841
    %v1844 = vld [vmem:[#allocation8] sm:$0xff]
    %v1845 = vld [vmem:[#allocation8 + $0x8] sm:$0xff]
    %v1846 = vld [vmem:[#allocation8 + $0x10] sm:$0xff]
    %v1847 = vld [vmem:[#allocation8 + $0x18] sm:$0xff]
    %v1848 = vld [vmem:[%s7] sm:$0x1]
    %v1850 = vlaneseq
    %v1851 = vshrl.u32 %v1850, 7
    %v1852 = vsub.s32 0, %v1851
    %v1853 = vrot.slane %v1848, %v1852
    %1856 = vrot.lane.b32.xlu0 %v1843, 64
    %v1857 = vpop.permute.xlu0 %1856
    %v1858 = vsel %vm215, %v1857, 0
    %1860 = vmatprep.subr.mxu0 0.0
    %1861 = vmatpush1.msra.mxu0 %v1844
    %1862 = vmatprep.subr.mxu0 0.0
    %1863 = vmatpush1.msra.mxu0 %v1845
    %1864 = vmatprep.subr.mxu0 0.0
    %1865 = vmatpush1.msra.mxu0 %v1846
    %1866 = vmatprep.subr.mxu0 0.0
    %1867 = vmatpush1.msra.mxu0 %v1847
    %1868 = vmatprep.subr.mxu0 0.0
    %1869 = vmatpush1.msra.mxu0 0.0
    %1870 = vmatprep.subr.mxu0 0.0
    %1871 = vmatpush1.msra.mxu0 0.0
    %1872 = vmatprep.subr.mxu0 0.0
    %1873 = vmatpush1.msra.mxu0 0.0
    %1874 = vmatprep.subr.mxu0 0.0
    %1875 = vmatpush1.msra.mxu0 0.0
    %1876 = vmatprep.subr.mxu0 0.0
    %1877 = vmatpush1.msra.mxu0 0.0
    %1878 = vmatprep.subr.mxu0 0.0
    %1879 = vmatpush1.msra.mxu0 0.0
    %1880 = vmatprep.subr.mxu0 0.0
    %1881 = vmatpush1.msra.mxu0 0.0
    %1882 = vmatprep.subr.mxu0 0.0
    %1883 = vmatpush1.msra.mxu0 0.0
    %1884 = vmatprep.subr.mxu0 0.0
    %1885 = vmatpush1.msra.mxu0 0.0
    %1886 = vmatprep.subr.mxu0 0.0
    %1887 = vmatpush1.msra.mxu0 0.0
    %1888 = vmatprep.subr.mxu0 0.0
    %1889 = vmatpush1.msra.mxu0 0.0
    %1890 = vmatprep.subr.mxu0 0.0
    %1891 = vmatpush1.msra.mxu0 0.0
    %1892 = vmatprep.subr.mxu0 0.0
    %1893 = vmatpush1.msra.mxu0 0.0
    %1894 = vmatprep.subr.mxu0 0.0
    %1895 = vmatpush1.msra.mxu0 0.0
    %1896 = vmatprep.subr.mxu0 0.0
    %1897 = vmatpush1.msra.mxu0 0.0
    %1898 = vmatprep.subr.mxu0 0.0
    %1899 = vmatpush1.msra.mxu0 0.0
    %1900 = vmatprep.subr.mxu0 0.0
    %1901 = vmatpush1.msra.mxu0 0.0
    %1902 = vmatprep.subr.mxu0 0.0
    %1903 = vmatpush1.msra.mxu0 0.0
    %1904 = vmatprep.subr.mxu0 0.0
    %1905 = vmatpush1.msra.mxu0 0.0
    %1906 = vmatprep.subr.mxu0 0.0
    %1907 = vmatpush1.msra.mxu0 0.0
    %1908 = vmatprep.subr.mxu0 0.0
    %1909 = vmatpush1.msra.mxu0 0.0
    %1910 = vmatprep.subr.mxu0 0.0
    %1911 = vmatpush1.msra.mxu0 0.0
    %1912 = vmatprep.subr.mxu0 0.0
    %1913 = vmatpush1.msra.mxu0 0.0
    %1914 = vmatprep.subr.mxu0 0.0
    %1915 = vmatpush1.msra.mxu0 0.0
    %1916 = vmatprep.subr.mxu0 0.0
    %1917 = vmatpush1.msra.mxu0 0.0
    %1918 = vmatprep.subr.mxu0 0.0
    %1919 = vmatpush1.msra.mxu0 0.0
    %1920 = vmatprep.subr.mxu0 0.0
    %1921 = vmatpush1.msra.mxu0 0.0
    %1922 = vmatprep.subr.mxu0 0.0
    %1923 = vmatpush1.msra.mxu0 0.0
    %1924 = vmatprep.mubr.f32.mxu0 0.0
    %1925 = vmatmul.mubr.f32.gmra.mrb[0].mxu0 %v1858
    %v1926 = vpop.f32.mrb[0].mxu0
    %v1927 = vadd.f32 %v1853, %v1926
    %v1928 = vpop.f32.mrb[0].mxu0
    %1929 = vdwg.mxu0
    %1930 = vst [vmem:[#allocation10] sm:$0xff] %v1927
    // Predicated region
    $region50: #{tpu_custom_call.1} parent=1 // pred_check
      _
    $region51: #{tpu_custom_call.1} parent=1 // pred_check_branch
      %1932 = sbr.rel (0) target = $region53
    $region52: #{tpu_custom_call.1} parent=1 // pred_region
      %s1934 = ssub.s32 128, 128
      %1935 = vsyncadd [#allocation4], %s1934
      %s1937 = sshll.u32 [#allocation10], 4
      %s1938 = int_to_ptr.vmem [resolvable:$true] %s1937
      %1940 = dma.vmem_to_hbm [thread:$0]  %s1938, 128, %s8, [#allocation4]
    $region53: #{tpu_custom_call.1} parent=1 // pred_fallthru
      _
    // Predicated region
    $region54: #{tpu_custom_call.1} parent=1 // pred_check
      _
    $region55: #{tpu_custom_call.1} parent=1 // pred_check_branch
      %1942 = sbr.rel (0) target = $region57
    $region56: #{tpu_custom_call.1} parent=1 // pred_region
      %1943 = dma.done [#allocation4], 128
    $region57: #{tpu_custom_call.1} parent=1 // pred_fallthru
      _
    %1944 = vsyncpa [#allocation3], 1
    %1945 = vsyncpa [#allocation6], 1
    %1946 = vsyncpa [#allocation9], 1
    %1947 = vsyncpa [#allocation4], 1

</llo_original>
